<compile_context>
chip_gen: v5e
topology: v5e:2x2
jax: 0.10.0
libtpu: 0.0.40
codegen_flags: <defaults>
</compile_context>

<pallas_src>
import jax
import jax.numpy as jnp
from jax.experimental import pallas as pl
from jax.experimental.pallas import tpu as pltpu


def _make_kernel(compute_dtype):
    f32 = jnp.float32

    def kernel(q_ref, k_ref, v_ref,
               wq_ref, bq_ref, wk_ref, bk_ref, wv_ref, bv_ref,
               wo_ref, bo_ref,
               o_ref,
               qp_ref, m_ref, l_ref, acc_ref):
        kv = pl.program_id(1)
        bt, tk, ep = k_ref.shape
        rows_q = q_ref.shape[0]          # bt * S
        s = rows_q // bt

        @pl.when(kv == 0)
        def _init():
            # Q projection (LoRA delta and 1/sqrt(E) already folded into
            # wq/bq by the wrapper).  Batch folded into the matmul M dim.
            q2 = q_ref[...].astype(compute_dtype)
            qp_ref[...] = (jnp.dot(q2, wq_ref[...], preferred_element_type=f32)
                           + bq_ref[...]).astype(qp_ref.dtype)
            m_ref[...] = jnp.full(m_ref.shape, -jnp.inf, f32)
            l_ref[...] = jnp.zeros(l_ref.shape, f32)
            acc_ref[...] = jnp.zeros(acc_ref.shape, f32)

        # K/V projection for this KV tile (batch folded into M; reshapes are
        # lane/sublane aligned because ep % 128 == 0 and tk % 8 == 0).
        k2 = k_ref[...].reshape(bt * tk, ep).astype(compute_dtype)
        v2 = v_ref[...].reshape(bt * tk, ep).astype(compute_dtype)
        Kb = (jnp.dot(k2, wk_ref[...], preferred_element_type=f32)
              + bk_ref[...]).reshape(bt, tk, ep)
        Vb = (jnp.dot(v2, wv_ref[...], preferred_element_type=f32)
              + bv_ref[...]).reshape(bt, tk, ep)

        Qb = qp_ref[...].reshape(bt, s, ep)

        # Scores for this KV tile; contraction on the last dims (no K
        # transpose materialized).  Scale already folded into W_Q.
        scores = jnp.einsum("bqe,bke->bqk",
                            Qb.astype(compute_dtype), Kb.astype(compute_dtype),
                            preferred_element_type=f32)

        # Online (streaming) softmax update.
        m_prev = m_ref[...]
        m_new = jnp.maximum(m_prev, jnp.max(scores, axis=-1, keepdims=True))
        alpha = jnp.exp(m_prev - m_new)
        p = jnp.exp(scores - m_new)
        l_ref[...] = alpha * l_ref[...] + jnp.sum(p, axis=-1, keepdims=True)
        acc_ref[...] = alpha * acc_ref[...] + jnp.einsum(
            "bqk,bke->bqe", p.astype(compute_dtype), Vb.astype(compute_dtype),
            preferred_element_type=f32)
        m_ref[...] = m_new

        @pl.when(kv == pl.num_programs(1) - 1)
        def _finish():
            # Deferred softmax normalization via EUP reciprocal, then output
            # projection; store is lane-dense (last dim ep % 128 == 0).
            inv = pl.reciprocal(l_ref[...], approx=True)
            ctx = (acc_ref[...] * inv).reshape(bt * s, ep)
            out = (jnp.dot(ctx.astype(compute_dtype), wo_ref[...],
                           preferred_element_type=f32) + bo_ref[...])
            o_ref[...] = out.astype(o_ref.dtype)

    return kernel


def _vmem_capacity_bytes():
    try:
        return int(pltpu.get_tpu_info().vmem_capacity_bytes)
    except Exception:
        return 64 << 20   # conservative: v7x per-TensorCore capacity


def _vmem_estimate(bt, S, tk, Ep, w_itemsize, c_itemsize):
    f = 4
    qkv_blocks = 2 * (bt * S * Ep * f) + 2 * 2 * (bt * tk * Ep * f)
    weight_blocks = 4 * Ep * Ep * w_itemsize + 4 * Ep * f      # single-buffered
    out_blocks = 2 * (bt * S * Ep * f)
    scratch = bt * S * Ep * c_itemsize + bt * S * Ep * f + 2 * bt * S * f
    temps = (2 * bt * tk * Ep * (f + c_itemsize)   # projected K/V (+ casts)
             + 3 * bt * S * tk * f                 # scores / exp / row sums
             + 2 * bt * S * Ep * f)                # ctx / epilogue temporaries
    return qkv_blocks + weight_blocks + out_blocks + scratch + temps + (2 << 20)


def _pick_kv_tile(S):
    if S <= 512:
        return S
    for tk in (512, 256, 128, 64, 32, 16, 8):
        if S % tk == 0:
            return tk
    return S


def lora_attention(query, key, value, params, *,
                   compute_dtype=jnp.float32, batch_tile=None, kv_tile=None):
    """query/key/value: (B, S, E) float32.  params: PyTorch-layout weights.

    compute_dtype=jnp.bfloat16 feeds bf16 operands to the MXU (f32
    accumulation, f32 softmax/elementwise) — beneficial on v5e/v6e/v7x alike.
    """
    B, S, E = query.shape
    assert S % 8 == 0, "sequence length must be a multiple of 8 (TODO: pad seq)"
    f32 = jnp.float32
    Ep = ((E + 127) // 128) * 128
    scale = 1.0 / float(E) ** 0.5

    # --- one-time wrapper-side prep (layout plumbing, not per-step work) ---
    def merged_t(W, A, Bm, s=1.0):
        w_eff = (W + Bm @ A) * s                 # LoRA merged (+ scale for Q)
        wt = w_eff.T.astype(compute_dtype)       # (in, out) so kernel does x @ W
        return jnp.pad(wt, ((0, Ep - E), (0, Ep - E)))

    def pad_bias(b, s=1.0):
        return jnp.pad((b * s).astype(f32).reshape(1, E), ((0, 0), (0, Ep - E)))

    def pad_embed(x):
        return x if Ep == E else jnp.pad(x, ((0, 0), (0, 0), (0, Ep - E)))

    wq_t = merged_t(params["W_Q"], params["A_Q"], params["B_Q"], scale)
    wk_t = merged_t(params["W_K"], params["A_K"], params["B_K"])
    wv_t = merged_t(params["W_V"], params["A_V"], params["B_V"])
    wo_t = jnp.pad(params["W_O"].T.astype(compute_dtype),
                   ((0, Ep - E), (0, Ep - E)))
    bq = pad_bias(params["b_Q"], scale)
    bk = pad_bias(params["b_K"])
    bv = pad_bias(params["b_V"])
    bo = pad_bias(params["b_O"])

    q_flat = pad_embed(query).reshape(B * S, Ep)     # (B*S, Ep) lane-dense
    k_pad = pad_embed(key)                           # (B, S, Ep)
    v_pad = pad_embed(value)

    # --- per-generation tile / VMEM selection ---
    if kv_tile is None:
        kv_tile = _pick_kv_tile(S)
    tk = kv_tile
    assert S % tk == 0 and (tk % 8 == 0 or tk == S)

    cap = _vmem_capacity_bytes()
    budget = (cap * 3) // 4
    wi = jnp.dtype(compute_dtype).itemsize
    ci = wi
    if batch_tile is None:
        cap_bt = max(1, B // 2)  # keep >=2 parallel grid steps for dual-TC chips
        batch_tile = 1
        for bt_try in range(1, cap_bt + 1):
            if B % bt_try == 0 and _vmem_estimate(bt_try, S, tk, Ep, wi, ci) <= budget:
                batch_tile = bt_try
    bt = batch_tile
    assert B % bt == 0, "batch_tile must divide batch"

    est = _vmem_estimate(bt, S, tk, Ep, wi, ci)
    vmem_limit = int(min(max(budget, est + (4 << 20)), cap - (2 << 20)))

    # --- BlockSpecs ---
    q_spec = pl.BlockSpec((bt * S, Ep), lambda b, k: (b, 0))
    kv_spec = pl.BlockSpec((bt, tk, Ep), lambda b, k: (b, k, 0))
    out_spec = pl.BlockSpec((bt * S, Ep), lambda b, k: (b, 0))

    def const_spec(shape, mode):
        idx = lambda b, k: (0,) * len(shape)
        if mode is None:
            return pl.BlockSpec(shape, idx)
        return pl.BlockSpec(shape, idx, pipeline_mode=mode)

    def build(weight_mode):
        w_spec = const_spec((Ep, Ep), weight_mode)
        b_spec = const_spec((1, Ep), weight_mode)
        grid_spec = pltpu.PrefetchScalarGridSpec(
            num_scalar_prefetch=0,
            grid=(B // bt, S // tk),
            in_specs=[q_spec, kv_spec, kv_spec,
                      w_spec, b_spec, w_spec, b_spec, w_spec, b_spec,
                      w_spec, b_spec],
            out_specs=out_spec,
            scratch_shapes=[
                pltpu.VMEM((bt * S, Ep), compute_dtype),  # projected Q
                pltpu.VMEM((bt, S, 1), f32),              # running max
                pltpu.VMEM((bt, S, 1), f32),              # running denom
                pltpu.VMEM((bt, S, Ep), f32),             # context accumulator
            ],
        )
        return pl.pallas_call(
            _make_kernel(compute_dtype),
            out_shape=jax.ShapeDtypeStruct((B * S, Ep), query.dtype),
            grid_spec=grid_spec,
            compiler_params=pltpu.CompilerParams(
                dimension_semantics=("parallel", "arbitrary"),
                vmem_limit_bytes=vmem_limit),
        )

    args = (q_flat, k_pad, v_pad, wq_t, bq, wk_t, bk, wv_t, bv, wo_t, bo)
    try:
        # Weights/biases have constant index maps -> single-buffer them.
        out2d = build(pl.Buffered(1))(*args)
    except Exception:
        # Fallback if this jax version rejects pipeline_mode on BlockSpec.
        out2d = build(None)(*args)

    return out2d.reshape(B, S, Ep)[..., :E]


def lora_attention_ref(query, key, value, params):
    """Plain-JAX reference identical to the PyTorch forward (explicit LoRA)."""
    E = query.shape[-1]
    lin = lambda x, W, b: x @ W.T + b
    Q = lin(query, params["W_Q"], params["b_Q"])
    K = lin(key,   params["W_K"], params["b_K"])
    V = lin(value, params["W_V"], params["b_V"])
    Q = Q + (query @ params["A_Q"].T) @ params["B_Q"].T
    K = K + (key   @ params["A_K"].T) @ params["B_K"].T
    V = V + (value @ params["A_V"].T) @ params["B_V"].T
    scores = jnp.einsum("bqe,bke->bqk", Q, K) / (E ** 0.5)
    attn = jax.nn.softmax(scores, axis=-1)
    context = jnp.einsum("bqk,bke->bqe", attn, V)
    return lin(context, params["W_O"], params["b_O"])


def init_params(key, embed_dim, r, lora_b_scale=0.0):
    ks = jax.random.split(key, 14)
    std_lin = 1.0 / (embed_dim ** 0.5)
    lin_w = lambda k: jax.random.normal(k, (embed_dim, embed_dim), jnp.float32) * std_lin
    lin_b = lambda k: jax.random.normal(k, (embed_dim,), jnp.float32) * std_lin
    lora_a = lambda k: jax.random.normal(k, (r, embed_dim), jnp.float32) * 0.02
    lora_b = lambda k: jax.random.normal(k, (embed_dim, r), jnp.float32) * lora_b_scale
    return {
        "W_Q": lin_w(ks[0]), "b_Q": lin_b(ks[1]),
        "W_K": lin_w(ks[2]), "b_K": lin_b(ks[3]),
        "W_V": lin_w(ks[4]), "b_V": lin_b(ks[5]),
        "W_O": lin_w(ks[6]), "b_O": lin_b(ks[7]),
        "A_Q": lora_a(ks[8]),  "B_Q": lora_b(ks[9]),
        "A_K": lora_a(ks[10]), "B_K": lora_b(ks[11]),
        "A_V": lora_a(ks[12]), "B_V": lora_b(ks[13]),
    }


if __name__ == "__main__":
    B, S, E, r = 2, 8, 32, 4
    root = jax.random.PRNGKey(0)
    kq, kk, kv, kp = jax.random.split(root, 4)
    query = jax.random.normal(kq, (B, S, E), jnp.float32)
    key_in = jax.random.normal(kk, (B, S, E), jnp.float32)
    value = jax.random.normal(kv, (B, S, E), jnp.float32)
    # PyTorch initializes B_* to zero (zero LoRA delta); use nonzero B_* here so
    # the merged LoRA path actually contributes and is verified by the check.
    params = init_params(kp, E, r, lora_b_scale=0.5)

    ref = lora_attention_ref(query, key_in, value, params)

    # f32 path (exact math except the approx EUP reciprocal in softmax).
    out = jax.block_until_ready(lora_attention(query, key_in, value, params))
    assert out.shape == (B, S, E)
    assert jnp.allclose(out, ref, atol=5e-3, rtol=5e-3), "f32 kernel mismatch vs reference"

    # bf16 matmul-input / f32-accumulation path (useful on v5e, v6e and v7x) —
    # loose bound, catches gross errors only.
    out_bf16 = jax.block_until_ready(
        lora_attention(query, key_in, value, params, compute_dtype=jnp.bfloat16))
    max_err = float(jnp.max(jnp.abs(out_bf16 - ref)))
    assert max_err < 0.25, f"bf16 kernel error too large: {max_err}"

    print("KERNEL_OK")
</pallas_src>

<mosaic_0001>
module attributes {stable_mosaic.version = 11 : i64} {
  func.func @kernel(%arg0: i32, %arg1: i32, %arg2: memref<8x128xf32, #tpu.memory_space<vmem>>, %arg3: memref<1x8x128xf32, #tpu.memory_space<vmem>>, %arg4: memref<1x8x128xf32, #tpu.memory_space<vmem>>, %arg5: memref<128x128xf32, #tpu.memory_space<vmem>>, %arg6: memref<1x128xf32, #tpu.memory_space<vmem>>, %arg7: memref<128x128xf32, #tpu.memory_space<vmem>>, %arg8: memref<1x128xf32, #tpu.memory_space<vmem>>, %arg9: memref<128x128xf32, #tpu.memory_space<vmem>>, %arg10: memref<1x128xf32, #tpu.memory_space<vmem>>, %arg11: memref<128x128xf32, #tpu.memory_space<vmem>>, %arg12: memref<1x128xf32, #tpu.memory_space<vmem>>, %arg13: memref<8x128xf32, #tpu.memory_space<vmem>>, %arg14: memref<8x128xf32, #tpu.memory_space<vmem>>, %arg15: memref<1x8x1xf32, #tpu.memory_space<vmem>>, %arg16: memref<1x8x1xf32, #tpu.memory_space<vmem>>, %arg17: memref<1x8x128xf32, #tpu.memory_space<vmem>>) attributes {dimension_semantics = [#tpu.dimension_semantics<parallel>, #tpu.dimension_semantics<arbitrary>], iteration_bounds = array<i64: 2, 1>, scalar_prefetch = 0 : i64, scratch_operands = 4 : i64, tpu.core_type = #tpu.core_type<tc>, window_params = [{transform_indices = @transform_0, window_bounds = array<i64: 8, 128>}, {transform_indices = @transform_1, window_bounds = array<i64: 1, 8, 128>}, {transform_indices = @transform_2, window_bounds = array<i64: 1, 8, 128>}, {pipeline_mode = #tpu.pipeline_mode<synchronous>, transform_indices = @transform_3, window_bounds = array<i64: 128, 128>}, {pipeline_mode = #tpu.pipeline_mode<synchronous>, transform_indices = @transform_4, window_bounds = array<i64: 1, 128>}, {pipeline_mode = #tpu.pipeline_mode<synchronous>, transform_indices = @transform_5, window_bounds = array<i64: 128, 128>}, {pipeline_mode = #tpu.pipeline_mode<synchronous>, transform_indices = @transform_6, window_bounds = array<i64: 1, 128>}, {pipeline_mode = #tpu.pipeline_mode<synchronous>, transform_indices = @transform_7, window_bounds = array<i64: 128, 128>}, {pipeline_mode = #tpu.pipeline_mode<synchronous>, transform_indices = @transform_8, window_bounds = array<i64: 1, 128>}, {pipeline_mode = #tpu.pipeline_mode<synchronous>, transform_indices = @transform_9, window_bounds = array<i64: 128, 128>}, {pipeline_mode = #tpu.pipeline_mode<synchronous>, transform_indices = @transform_10, window_bounds = array<i64: 1, 128>}, {transform_indices = @transform_11, window_bounds = array<i64: 8, 128>}]} {
    %c0_i32 = arith.constant 0 : i32
    %0 = arith.cmpi eq, %arg1, %c0_i32 : i32
    %1 = arith.extui %0 : i1 to i32
    %c0_i32_0 = arith.constant 0 : i32
    %2 = arith.cmpi ne, %1, %c0_i32_0 : i32
    scf.if %2 {
      %c0_41 = arith.constant 0 : index
      %c0_42 = arith.constant 0 : index
      %47 = vector.load %arg2[%c0_41, %c0_42] : memref<8x128xf32, #tpu.memory_space<vmem>>, vector<8x128xf32>
      %c0_43 = arith.constant 0 : index
      %c0_44 = arith.constant 0 : index
      %48 = vector.load %arg5[%c0_43, %c0_44] : memref<128x128xf32, #tpu.memory_space<vmem>>, vector<128x128xf32>
      %cst_45 = arith.constant dense<0.000000e+00> : vector<8x128xf32>
      %49 = tpu.matmul %47, %48, %cst_45 {dimension_numbers = #tpu.dot_dimension_numbers<[1], [0], [0], [1], [0, 0, 1, 1], [], []>} : vector<8x128xf32>, vector<128x128xf32>, vector<8x128xf32> -> vector<8x128xf32>
      %c0_46 = arith.constant 0 : index
      %c0_47 = arith.constant 0 : index
      %50 = vector.load %arg6[%c0_46, %c0_47] : memref<1x128xf32, #tpu.memory_space<vmem>>, vector<1x128xf32>
      %51 = vector.broadcast %50 : vector<1x128xf32> to vector<8x128xf32>
      %52 = arith.addf %49, %51 : vector<8x128xf32>
      %c0_48 = arith.constant 0 : index
      %c0_49 = arith.constant 0 : index
      %53 = vector.load %arg14[%c0_48, %c0_49] : memref<8x128xf32, #tpu.memory_space<vmem>>, vector<8x128xf32>
      tpu.vector_store %arg14[%c0_48, %c0_49], %52 {strides = array<i32>} : memref<8x128xf32, #tpu.memory_space<vmem>>, vector<8x128xf32>,
      %cst_50 = arith.constant 0xFF800000 : f32
      %54 = vector.broadcast %cst_50 : f32 to vector<1x8x1xf32>
      %c0_51 = arith.constant 0 : index
      %c0_52 = arith.constant 0 : index
      %c0_53 = arith.constant 0 : index
      %55 = vector.load %arg15[%c0_51, %c0_52, %c0_53] : memref<1x8x1xf32, #tpu.memory_space<vmem>>, vector<1x8x1xf32>
      tpu.vector_store %arg15[%c0_51, %c0_52, %c0_53], %54 {strides = array<i32>} : memref<1x8x1xf32, #tpu.memory_space<vmem>>, vector<1x8x1xf32>,
      %cst_54 = arith.constant 0.000000e+00 : f32
      %56 = vector.broadcast %cst_54 : f32 to vector<1x8x1xf32>
      %c0_55 = arith.constant 0 : index
      %c0_56 = arith.constant 0 : index
      %c0_57 = arith.constant 0 : index
      %57 = vector.load %arg16[%c0_55, %c0_56, %c0_57] : memref<1x8x1xf32, #tpu.memory_space<vmem>>, vector<1x8x1xf32>
      tpu.vector_store %arg16[%c0_55, %c0_56, %c0_57], %56 {strides = array<i32>} : memref<1x8x1xf32, #tpu.memory_space<vmem>>, vector<1x8x1xf32>,
      %cst_58 = arith.constant 0.000000e+00 : f32
      %58 = vector.broadcast %cst_58 : f32 to vector<1x8x128xf32>
      %c0_59 = arith.constant 0 : index
      %c0_60 = arith.constant 0 : index
      %c0_61 = arith.constant 0 : index
      %59 = vector.load %arg17[%c0_59, %c0_60, %c0_61] : memref<1x8x128xf32, #tpu.memory_space<vmem>>, vector<1x8x128xf32>
      tpu.vector_store %arg17[%c0_59, %c0_60, %c0_61], %58 {strides = array<i32>} : memref<1x8x128xf32, #tpu.memory_space<vmem>>, vector<1x8x128xf32>,
    } else {
    }
    %c0 = arith.constant 0 : index
    %c0_1 = arith.constant 0 : index
    %c0_2 = arith.constant 0 : index
    %3 = vector.load %arg3[%c0, %c0_1, %c0_2] : memref<1x8x128xf32, #tpu.memory_space<vmem>>, vector<1x8x128xf32>
    %4 = vector.shape_cast %3 : vector<1x8x128xf32> to vector<8x128xf32>
    %c0_3 = arith.constant 0 : index
    %c0_4 = arith.constant 0 : index
    %c0_5 = arith.constant 0 : index
    %5 = vector.load %arg4[%c0_3, %c0_4, %c0_5] : memref<1x8x128xf32, #tpu.memory_space<vmem>>, vector<1x8x128xf32>
    %6 = vector.shape_cast %5 : vector<1x8x128xf32> to vector<8x128xf32>
    %c0_6 = arith.constant 0 : index
    %c0_7 = arith.constant 0 : index
    %7 = vector.load %arg7[%c0_6, %c0_7] : memref<128x128xf32, #tpu.memory_space<vmem>>, vector<128x128xf32>
    %cst = arith.constant dense<0.000000e+00> : vector<8x128xf32>
    %8 = tpu.matmul %4, %7, %cst {dimension_numbers = #tpu.dot_dimension_numbers<[1], [0], [0], [1], [0, 0, 1, 1], [], []>} : vector<8x128xf32>, vector<128x128xf32>, vector<8x128xf32> -> vector<8x128xf32>
    %c0_8 = arith.constant 0 : index
    %c0_9 = arith.constant 0 : index
    %9 = vector.load %arg8[%c0_8, %c0_9] : memref<1x128xf32, #tpu.memory_space<vmem>>, vector<1x128xf32>
    %10 = vector.broadcast %9 : vector<1x128xf32> to vector<8x128xf32>
    %11 = arith.addf %8, %10 : vector<8x128xf32>
    %12 = vector.shape_cast %11 : vector<8x128xf32> to vector<1x8x128xf32>
    %c0_10 = arith.constant 0 : index
    %c0_11 = arith.constant 0 : index
    %13 = vector.load %arg9[%c0_10, %c0_11] : memref<128x128xf32, #tpu.memory_space<vmem>>, vector<128x128xf32>
    %cst_12 = arith.constant dense<0.000000e+00> : vector<8x128xf32>
    %14 = tpu.matmul %6, %13, %cst_12 {dimension_numbers = #tpu.dot_dimension_numbers<[1], [0], [0], [1], [0, 0, 1, 1], [], []>} : vector<8x128xf32>, vector<128x128xf32>, vector<8x128xf32> -> vector<8x128xf32>
    %c0_13 = arith.constant 0 : index
    %c0_14 = arith.constant 0 : index
    %15 = vector.load %arg10[%c0_13, %c0_14] : memref<1x128xf32, #tpu.memory_space<vmem>>, vector<1x128xf32>
    %16 = vector.broadcast %15 : vector<1x128xf32> to vector<8x128xf32>
    %17 = arith.addf %14, %16 : vector<8x128xf32>
    %18 = vector.shape_cast %17 : vector<8x128xf32> to vector<1x8x128xf32>
    %c0_15 = arith.constant 0 : index
    %c0_16 = arith.constant 0 : index
    %19 = vector.load %arg14[%c0_15, %c0_16] : memref<8x128xf32, #tpu.memory_space<vmem>>, vector<8x128xf32>
    %20 = vector.shape_cast %19 : vector<8x128xf32> to vector<1x8x128xf32>
    "tpu.trace_start"() <{level = 10 : i32, message = "bqe,bke->bqk"}> : () -> ()
    %cst_17 = arith.constant dense<0.000000e+00> : vector<1x8x8xf32>
    %21 = tpu.matmul %20, %12, %cst_17 {dimension_numbers = #tpu.dot_dimension_numbers<[2], [2], [1], [1], [0, 0, 0, 1, 1, 1], [0], [0]>} : vector<1x8x128xf32>, vector<1x8x128xf32>, vector<1x8x8xf32> -> vector<1x8x8xf32>
    "tpu.trace_stop"() : () -> ()
    %c0_18 = arith.constant 0 : index
    %c0_19 = arith.constant 0 : index
    %c0_20 = arith.constant 0 : index
    %22 = vector.load %arg15[%c0_18, %c0_19, %c0_20] : memref<1x8x1xf32, #tpu.memory_space<vmem>>, vector<1x8x1xf32>
    %cst_21 = arith.constant dense<0xFF800000> : vector<1x8xf32>
    %23 = vector.multi_reduction <maximumf>, %21, %cst_21 [2] : vector<1x8x8xf32> to vector<1x8xf32>
    %24 = vector.shape_cast %23 : vector<1x8xf32> to vector<1x8x1xf32>
    %25 = arith.maximumf %22, %24 : vector<1x8x1xf32>
    %26 = arith.subf %22, %25 : vector<1x8x1xf32>
    %27 = math.exp %26 : vector<1x8x1xf32>
    %28 = vector.broadcast %25 : vector<1x8x1xf32> to vector<1x8x8xf32>
    %29 = arith.subf %21, %28 : vector<1x8x8xf32>
    %30 = math.exp %29 : vector<1x8x8xf32>
    %c0_22 = arith.constant 0 : index
    %c0_23 = arith.constant 0 : index
    %c0_24 = arith.constant 0 : index
    %31 = vector.load %arg16[%c0_22, %c0_23, %c0_24] : memref<1x8x1xf32, #tpu.memory_space<vmem>>, vector<1x8x1xf32>
    %32 = arith.mulf %27, %31 : vector<1x8x1xf32>
    %cst_25 = arith.constant dense<0.000000e+00> : vector<1x8xf32>
    %33 = vector.multi_reduction <add>, %30, %cst_25 [2] : vector<1x8x8xf32> to vector<1x8xf32>
    %34 = vector.shape_cast %33 : vector<1x8xf32> to vector<1x8x1xf32>
    %35 = arith.addf %32, %34 : vector<1x8x1xf32>
    %c0_26 = arith.constant 0 : index
    %c0_27 = arith.constant 0 : index
    %c0_28 = arith.constant 0 : index
    %36 = vector.load %arg16[%c0_26, %c0_27, %c0_28] : memref<1x8x1xf32, #tpu.memory_space<vmem>>, vector<1x8x1xf32>
    tpu.vector_store %arg16[%c0_26, %c0_27, %c0_28], %35 {strides = array<i32>} : memref<1x8x1xf32, #tpu.memory_space<vmem>>, vector<1x8x1xf32>,
    %c0_29 = arith.constant 0 : index
    %c0_30 = arith.constant 0 : index
    %c0_31 = arith.constant 0 : index
    %37 = vector.load %arg17[%c0_29, %c0_30, %c0_31] : memref<1x8x128xf32, #tpu.memory_space<vmem>>, vector<1x8x128xf32>
    %38 = vector.broadcast %27 : vector<1x8x1xf32> to vector<1x8x128xf32>
    %39 = arith.mulf %38, %37 : vector<1x8x128xf32>
    "tpu.trace_start"() <{level = 10 : i32, message = "bqk,bke->bqe"}> : () -> ()
    %cst_32 = arith.constant dense<0.000000e+00> : vector<1x8x128xf32>
    %40 = tpu.matmul %30, %18, %cst_32 {dimension_numbers = #tpu.dot_dimension_numbers<[2], [1], [1], [2], [0, 0, 0, 1, 1, 2], [0], [0]>} : vector<1x8x8xf32>, vector<1x8x128xf32>, vector<1x8x128xf32> -> vector<1x8x128xf32>
    "tpu.trace_stop"() : () -> ()
    %41 = arith.addf %39, %40 : vector<1x8x128xf32>
    %c0_33 = arith.constant 0 : index
    %c0_34 = arith.constant 0 : index
    %c0_35 = arith.constant 0 : index
    %42 = vector.load %arg17[%c0_33, %c0_34, %c0_35] : memref<1x8x128xf32, #tpu.memory_space<vmem>>, vector<1x8x128xf32>
    tpu.vector_store %arg17[%c0_33, %c0_34, %c0_35], %41 {strides = array<i32>} : memref<1x8x128xf32, #tpu.memory_space<vmem>>, vector<1x8x128xf32>,
    %c0_36 = arith.constant 0 : index
    %c0_37 = arith.constant 0 : index
    %c0_38 = arith.constant 0 : index
    %43 = vector.load %arg15[%c0_36, %c0_37, %c0_38] : memref<1x8x1xf32, #tpu.memory_space<vmem>>, vector<1x8x1xf32>
    tpu.vector_store %arg15[%c0_36, %c0_37, %c0_38], %25 {strides = array<i32>} : memref<1x8x1xf32, #tpu.memory_space<vmem>>, vector<1x8x1xf32>,
    %c0_i32_39 = arith.constant 0 : i32
    %44 = arith.cmpi eq, %arg1, %c0_i32_39 : i32
    %45 = arith.extui %44 : i1 to i32
    %c0_i32_40 = arith.constant 0 : i32
    %46 = arith.cmpi ne, %45, %c0_i32_40 : i32
    scf.if %46 {
      %c0_41 = arith.constant 0 : index
      %c0_42 = arith.constant 0 : index
      %c0_43 = arith.constant 0 : index
      %47 = vector.load %arg16[%c0_41, %c0_42, %c0_43] : memref<1x8x1xf32, #tpu.memory_space<vmem>>, vector<1x8x1xf32>
      %48 = tpu.reciprocal %47 {approx = true} : vector<1x8x1xf32> -> vector<1x8x1xf32>
      %c0_44 = arith.constant 0 : index
      %c0_45 = arith.constant 0 : index
      %c0_46 = arith.constant 0 : index
      %49 = vector.load %arg17[%c0_44, %c0_45, %c0_46] : memref<1x8x128xf32, #tpu.memory_space<vmem>>, vector<1x8x128xf32>
      %50 = vector.broadcast %48 : vector<1x8x1xf32> to vector<1x8x128xf32>
      %51 = arith.mulf %49, %50 : vector<1x8x128xf32>
      %52 = vector.shape_cast %51 : vector<1x8x128xf32> to vector<8x128xf32>
      %c0_47 = arith.constant 0 : index
      %c0_48 = arith.constant 0 : index
      %53 = vector.load %arg11[%c0_47, %c0_48] : memref<128x128xf32, #tpu.memory_space<vmem>>, vector<128x128xf32>
      %cst_49 = arith.constant dense<0.000000e+00> : vector<8x128xf32>
      %54 = tpu.matmul %52, %53, %cst_49 {dimension_numbers = #tpu.dot_dimension_numbers<[1], [0], [0], [1], [0, 0, 1, 1], [], []>} : vector<8x128xf32>, vector<128x128xf32>, vector<8x128xf32> -> vector<8x128xf32>
      %c0_50 = arith.constant 0 : index
      %c0_51 = arith.constant 0 : index
      %55 = vector.load %arg12[%c0_50, %c0_51] : memref<1x128xf32, #tpu.memory_space<vmem>>, vector<1x128xf32>
      %56 = vector.broadcast %55 : vector<1x128xf32> to vector<8x128xf32>
      %57 = arith.addf %54, %56 : vector<8x128xf32>
      %c0_52 = arith.constant 0 : index
      %c0_53 = arith.constant 0 : index
      %58 = vector.load %arg13[%c0_52, %c0_53] : memref<8x128xf32, #tpu.memory_space<vmem>>, vector<8x128xf32>
      tpu.vector_store %arg13[%c0_52, %c0_53], %57 {strides = array<i32>} : memref<8x128xf32, #tpu.memory_space<vmem>>, vector<8x128xf32>,
    } else {
    }
    return
  }
  func.func @transform_0(%arg0: i32, %arg1: i32) -> (i32, i32) {
    %c0_i32 = arith.constant 0 : i32
    %c0_i32_0 = arith.constant 0 : i32
    return %arg0, %c0_i32 : i32, i32
  }
  func.func @transform_1(%arg0: i32, %arg1: i32) -> (i32, i32, i32) {
    %c0_i32 = arith.constant 0 : i32
    %c0_i32_0 = arith.constant 0 : i32
    return %arg0, %arg1, %c0_i32 : i32, i32, i32
  }
  func.func @transform_2(%arg0: i32, %arg1: i32) -> (i32, i32, i32) {
    %c0_i32 = arith.constant 0 : i32
    %c0_i32_0 = arith.constant 0 : i32
    return %arg0, %arg1, %c0_i32 : i32, i32, i32
  }
  func.func @transform_3(%arg0: i32, %arg1: i32) -> (i32, i32) {
    %c0_i32 = arith.constant 0 : i32
    %c0_i32_0 = arith.constant 0 : i32
    %c0_i32_1 = arith.constant 0 : i32
    return %c0_i32, %c0_i32_0 : i32, i32
  }
  func.func @transform_4(%arg0: i32, %arg1: i32) -> (i32, i32) {
    %c0_i32 = arith.constant 0 : i32
    %c0_i32_0 = arith.constant 0 : i32
    %c0_i32_1 = arith.constant 0 : i32
    return %c0_i32, %c0_i32_0 : i32, i32
  }
  func.func @transform_5(%arg0: i32, %arg1: i32) -> (i32, i32) {
    %c0_i32 = arith.constant 0 : i32
    %c0_i32_0 = arith.constant 0 : i32
    %c0_i32_1 = arith.constant 0 : i32
    return %c0_i32, %c0_i32_0 : i32, i32
  }
  func.func @transform_6(%arg0: i32, %arg1: i32) -> (i32, i32) {
    %c0_i32 = arith.constant 0 : i32
    %c0_i32_0 = arith.constant 0 : i32
    %c0_i32_1 = arith.constant 0 : i32
    return %c0_i32, %c0_i32_0 : i32, i32
  }
  func.func @transform_7(%arg0: i32, %arg1: i32) -> (i32, i32) {
    %c0_i32 = arith.constant 0 : i32
    %c0_i32_0 = arith.constant 0 : i32
    %c0_i32_1 = arith.constant 0 : i32
    return %c0_i32, %c0_i32_0 : i32, i32
  }
  func.func @transform_8(%arg0: i32, %arg1: i32) -> (i32, i32) {
    %c0_i32 = arith.constant 0 : i32
    %c0_i32_0 = arith.constant 0 : i32
    %c0_i32_1 = arith.constant 0 : i32
    return %c0_i32, %c0_i32_0 : i32, i32
  }
  func.func @transform_9(%arg0: i32, %arg1: i32) -> (i32, i32) {
    %c0_i32 = arith.constant 0 : i32
    %c0_i32_0 = arith.constant 0 : i32
    %c0_i32_1 = arith.constant 0 : i32
    return %c0_i32, %c0_i32_0 : i32, i32
  }
  func.func @transform_10(%arg0: i32, %arg1: i32) -> (i32, i32) {
    %c0_i32 = arith.constant 0 : i32
    %c0_i32_0 = arith.constant 0 : i32
    %c0_i32_1 = arith.constant 0 : i32
    return %c0_i32, %c0_i32_0 : i32, i32
  }
  func.func @transform_11(%arg0: i32, %arg1: i32) -> (i32, i32) {
    %c0_i32 = arith.constant 0 : i32
    %c0_i32_0 = arith.constant 0 : i32
    return %arg0, %c0_i32 : i32, i32
  }
}

module attributes {stable_mosaic.version = 11 : i64} {
  func.func @kernel(%arg0: i32, %arg1: i32, %arg2: memref<8x128xf32, #tpu.memory_space<vmem>>, %arg3: memref<1x8x128xf32, #tpu.memory_space<vmem>>, %arg4: memref<1x8x128xf32, #tpu.memory_space<vmem>>, %arg5: memref<128x128xf32, #tpu.memory_space<vmem>>, %arg6: memref<1x128xf32, #tpu.memory_space<vmem>>, %arg7: memref<128x128xf32, #tpu.memory_space<vmem>>, %arg8: memref<1x128xf32, #tpu.memory_space<vmem>>, %arg9: memref<128x128xf32, #tpu.memory_space<vmem>>, %arg10: memref<1x128xf32, #tpu.memory_space<vmem>>, %arg11: memref<128x128xf32, #tpu.memory_space<vmem>>, %arg12: memref<1x128xf32, #tpu.memory_space<vmem>>, %arg13: memref<8x128xf32, #tpu.memory_space<vmem>>, %arg14: memref<8x128xf32, #tpu.memory_space<vmem>>, %arg15: memref<1x8x1xf32, #tpu.memory_space<vmem>>, %arg16: memref<1x8x1xf32, #tpu.memory_space<vmem>>, %arg17: memref<1x8x128xf32, #tpu.memory_space<vmem>>) attributes {dimension_semantics = [#tpu.dimension_semantics<parallel>, #tpu.dimension_semantics<arbitrary>], iteration_bounds = array<i64: 2, 1>, scalar_prefetch = 0 : i64, scratch_operands = 4 : i64, tpu.core_type = #tpu.core_type<tc>, window_params = [{transform_indices = @transform_0, window_bounds = array<i64: 8, 128>}, {transform_indices = @transform_1, window_bounds = array<i64: 1, 8, 128>}, {transform_indices = @transform_2, window_bounds = array<i64: 1, 8, 128>}, {pipeline_mode = #tpu.pipeline_mode<synchronous>, transform_indices = @transform_3, window_bounds = array<i64: 128, 128>}, {pipeline_mode = #tpu.pipeline_mode<synchronous>, transform_indices = @transform_4, window_bounds = array<i64: 1, 128>}, {pipeline_mode = #tpu.pipeline_mode<synchronous>, transform_indices = @transform_5, window_bounds = array<i64: 128, 128>}, {pipeline_mode = #tpu.pipeline_mode<synchronous>, transform_indices = @transform_6, window_bounds = array<i64: 1, 128>}, {pipeline_mode = #tpu.pipeline_mode<synchronous>, transform_indices = @transform_7, window_bounds = array<i64: 128, 128>}, {pipeline_mode = #tpu.pipeline_mode<synchronous>, transform_indices = @transform_8, window_bounds = array<i64: 1, 128>}, {pipeline_mode = #tpu.pipeline_mode<synchronous>, transform_indices = @transform_9, window_bounds = array<i64: 128, 128>}, {pipeline_mode = #tpu.pipeline_mode<synchronous>, transform_indices = @transform_10, window_bounds = array<i64: 1, 128>}, {transform_indices = @transform_11, window_bounds = array<i64: 8, 128>}]} {
    %c0_i32 = arith.constant 0 : i32
    %0 = arith.cmpi eq, %arg1, %c0_i32 : i32
    %1 = arith.extui %0 : i1 to i32
    %c0_i32_0 = arith.constant 0 : i32
    %2 = arith.cmpi ne, %1, %c0_i32_0 : i32
    scf.if %2 {
      %c0_41 = arith.constant 0 : index
      %c0_42 = arith.constant 0 : index
      %47 = vector.load %arg2[%c0_41, %c0_42] : memref<8x128xf32, #tpu.memory_space<vmem>>, vector<8x128xf32>
      %c0_43 = arith.constant 0 : index
      %c0_44 = arith.constant 0 : index
      %48 = vector.load %arg5[%c0_43, %c0_44] : memref<128x128xf32, #tpu.memory_space<vmem>>, vector<128x128xf32>
      %cst_45 = arith.constant dense<0.000000e+00> : vector<8x128xf32>
      %49 = tpu.matmul %47, %48, %cst_45 {dimension_numbers = #tpu.dot_dimension_numbers<[1], [0], [0], [1], [0, 0, 1, 1], [], []>} : vector<8x128xf32>, vector<128x128xf32>, vector<8x128xf32> -> vector<8x128xf32>
      %c0_46 = arith.constant 0 : index
      %c0_47 = arith.constant 0 : index
      %50 = vector.load %arg6[%c0_46, %c0_47] : memref<1x128xf32, #tpu.memory_space<vmem>>, vector<1x128xf32>
      %51 = vector.broadcast %50 : vector<1x128xf32> to vector<8x128xf32>
      %52 = arith.addf %49, %51 : vector<8x128xf32>
      %c0_48 = arith.constant 0 : index
      %c0_49 = arith.constant 0 : index
      %53 = vector.load %arg14[%c0_48, %c0_49] : memref<8x128xf32, #tpu.memory_space<vmem>>, vector<8x128xf32>
      tpu.vector_store %arg14[%c0_48, %c0_49], %52 {strides = array<i32>} : memref<8x128xf32, #tpu.memory_space<vmem>>, vector<8x128xf32>,
      %cst_50 = arith.constant 0xFF800000 : f32
      %54 = vector.broadcast %cst_50 : f32 to vector<1x8x1xf32>
      %c0_51 = arith.constant 0 : index
      %c0_52 = arith.constant 0 : index
      %c0_53 = arith.constant 0 : index
      %55 = vector.load %arg15[%c0_51, %c0_52, %c0_53] : memref<1x8x1xf32, #tpu.memory_space<vmem>>, vector<1x8x1xf32>
      tpu.vector_store %arg15[%c0_51, %c0_52, %c0_53], %54 {strides = array<i32>} : memref<1x8x1xf32, #tpu.memory_space<vmem>>, vector<1x8x1xf32>,
      %cst_54 = arith.constant 0.000000e+00 : f32
      %56 = vector.broadcast %cst_54 : f32 to vector<1x8x1xf32>
      %c0_55 = arith.constant 0 : index
      %c0_56 = arith.constant 0 : index
      %c0_57 = arith.constant 0 : index
      %57 = vector.load %arg16[%c0_55, %c0_56, %c0_57] : memref<1x8x1xf32, #tpu.memory_space<vmem>>, vector<1x8x1xf32>
      tpu.vector_store %arg16[%c0_55, %c0_56, %c0_57], %56 {strides = array<i32>} : memref<1x8x1xf32, #tpu.memory_space<vmem>>, vector<1x8x1xf32>,
      %cst_58 = arith.constant 0.000000e+00 : f32
      %58 = vector.broadcast %cst_58 : f32 to vector<1x8x128xf32>
      %c0_59 = arith.constant 0 : index
      %c0_60 = arith.constant 0 : index
      %c0_61 = arith.constant 0 : index
      %59 = vector.load %arg17[%c0_59, %c0_60, %c0_61] : memref<1x8x128xf32, #tpu.memory_space<vmem>>, vector<1x8x128xf32>
      tpu.vector_store %arg17[%c0_59, %c0_60, %c0_61], %58 {strides = array<i32>} : memref<1x8x128xf32, #tpu.memory_space<vmem>>, vector<1x8x128xf32>,
    } else {
    }
    %c0 = arith.constant 0 : index
    %c0_1 = arith.constant 0 : index
    %c0_2 = arith.constant 0 : index
    %3 = vector.load %arg3[%c0, %c0_1, %c0_2] : memref<1x8x128xf32, #tpu.memory_space<vmem>>, vector<1x8x128xf32>
    %4 = vector.shape_cast %3 : vector<1x8x128xf32> to vector<8x128xf32>
    %c0_3 = arith.constant 0 : index
    %c0_4 = arith.constant 0 : index
    %c0_5 = arith.constant 0 : index
    %5 = vector.load %arg4[%c0_3, %c0_4, %c0_5] : memref<1x8x128xf32, #tpu.memory_space<vmem>>, vector<1x8x128xf32>
    %6 = vector.shape_cast %5 : vector<1x8x128xf32> to vector<8x128xf32>
    %c0_6 = arith.constant 0 : index
    %c0_7 = arith.constant 0 : index
    %7 = vector.load %arg7[%c0_6, %c0_7] : memref<128x128xf32, #tpu.memory_space<vmem>>, vector<128x128xf32>
    %cst = arith.constant dense<0.000000e+00> : vector<8x128xf32>
    %8 = tpu.matmul %4, %7, %cst {dimension_numbers = #tpu.dot_dimension_numbers<[1], [0], [0], [1], [0, 0, 1, 1], [], []>} : vector<8x128xf32>, vector<128x128xf32>, vector<8x128xf32> -> vector<8x128xf32>
    %c0_8 = arith.constant 0 : index
    %c0_9 = arith.constant 0 : index
    %9 = vector.load %arg8[%c0_8, %c0_9] : memref<1x128xf32, #tpu.memory_space<vmem>>, vector<1x128xf32>
    %10 = vector.broadcast %9 : vector<1x128xf32> to vector<8x128xf32>
    %11 = arith.addf %8, %10 : vector<8x128xf32>
    %12 = vector.shape_cast %11 : vector<8x128xf32> to vector<1x8x128xf32>
    %c0_10 = arith.constant 0 : index
    %c0_11 = arith.constant 0 : index
    %13 = vector.load %arg9[%c0_10, %c0_11] : memref<128x128xf32, #tpu.memory_space<vmem>>, vector<128x128xf32>
    %cst_12 = arith.constant dense<0.000000e+00> : vector<8x128xf32>
    %14 = tpu.matmul %6, %13, %cst_12 {dimension_numbers = #tpu.dot_dimension_numbers<[1], [0], [0], [1], [0, 0, 1, 1], [], []>} : vector<8x128xf32>, vector<128x128xf32>, vector<8x128xf32> -> vector<8x128xf32>
    %c0_13 = arith.constant 0 : index
    %c0_14 = arith.constant 0 : index
    %15 = vector.load %arg10[%c0_13, %c0_14] : memref<1x128xf32, #tpu.memory_space<vmem>>, vector<1x128xf32>
    %16 = vector.broadcast %15 : vector<1x128xf32> to vector<8x128xf32>
    %17 = arith.addf %14, %16 : vector<8x128xf32>
    %18 = vector.shape_cast %17 : vector<8x128xf32> to vector<1x8x128xf32>
    %c0_15 = arith.constant 0 : index
    %c0_16 = arith.constant 0 : index
    %19 = vector.load %arg14[%c0_15, %c0_16] : memref<8x128xf32, #tpu.memory_space<vmem>>, vector<8x128xf32>
    %20 = vector.shape_cast %19 : vector<8x128xf32> to vector<1x8x128xf32>
    "tpu.trace_start"() <{level = 10 : i32, message = "bqe,bke->bqk"}> : () -> ()
    %cst_17 = arith.constant dense<0.000000e+00> : vector<1x8x8xf32>
    %21 = tpu.matmul %20, %12, %cst_17 {dimension_numbers = #tpu.dot_dimension_numbers<[2], [2], [1], [1], [0, 0, 0, 1, 1, 1], [0], [0]>} : vector<1x8x128xf32>, vector<1x8x128xf32>, vector<1x8x8xf32> -> vector<1x8x8xf32>
    "tpu.trace_stop"() : () -> ()
    %c0_18 = arith.constant 0 : index
    %c0_19 = arith.constant 0 : index
    %c0_20 = arith.constant 0 : index
    %22 = vector.load %arg15[%c0_18, %c0_19, %c0_20] : memref<1x8x1xf32, #tpu.memory_space<vmem>>, vector<1x8x1xf32>
    %cst_21 = arith.constant dense<0xFF800000> : vector<1x8xf32>
    %23 = vector.multi_reduction <maximumf>, %21, %cst_21 [2] : vector<1x8x8xf32> to vector<1x8xf32>
    %24 = vector.shape_cast %23 : vector<1x8xf32> to vector<1x8x1xf32>
    %25 = arith.maximumf %22, %24 : vector<1x8x1xf32>
    %26 = arith.subf %22, %25 : vector<1x8x1xf32>
    %27 = math.exp %26 : vector<1x8x1xf32>
    %28 = vector.broadcast %25 : vector<1x8x1xf32> to vector<1x8x8xf32>
    %29 = arith.subf %21, %28 : vector<1x8x8xf32>
    %30 = math.exp %29 : vector<1x8x8xf32>
    %c0_22 = arith.constant 0 : index
    %c0_23 = arith.constant 0 : index
    %c0_24 = arith.constant 0 : index
    %31 = vector.load %arg16[%c0_22, %c0_23, %c0_24] : memref<1x8x1xf32, #tpu.memory_space<vmem>>, vector<1x8x1xf32>
    %32 = arith.mulf %27, %31 : vector<1x8x1xf32>
    %cst_25 = arith.constant dense<0.000000e+00> : vector<1x8xf32>
    %33 = vector.multi_reduction <add>, %30, %cst_25 [2] : vector<1x8x8xf32> to vector<1x8xf32>
    %34 = vector.shape_cast %33 : vector<1x8xf32> to vector<1x8x1xf32>
    %35 = arith.addf %32, %34 : vector<1x8x1xf32>
    %c0_26 = arith.constant 0 : index
    %c0_27 = arith.constant 0 : index
    %c0_28 = arith.constant 0 : index
    %36 = vector.load %arg16[%c0_26, %c0_27, %c0_28] : memref<1x8x1xf32, #tpu.memory_space<vmem>>, vector<1x8x1xf32>
    tpu.vector_store %arg16[%c0_26, %c0_27, %c0_28], %35 {strides = array<i32>} : memref<1x8x1xf32, #tpu.memory_space<vmem>>, vector<1x8x1xf32>,
    %c0_29 = arith.constant 0 : index
    %c0_30 = arith.constant 0 : index
    %c0_31 = arith.constant 0 : index
    %37 = vector.load %arg17[%c0_29, %c0_30, %c0_31] : memref<1x8x128xf32, #tpu.memory_space<vmem>>, vector<1x8x128xf32>
    %38 = vector.broadcast %27 : vector<1x8x1xf32> to vector<1x8x128xf32>
    %39 = arith.mulf %38, %37 : vector<1x8x128xf32>
    "tpu.trace_start"() <{level = 10 : i32, message = "bqk,bke->bqe"}> : () -> ()
    %cst_32 = arith.constant dense<0.000000e+00> : vector<1x8x128xf32>
    %40 = tpu.matmul %30, %18, %cst_32 {dimension_numbers = #tpu.dot_dimension_numbers<[2], [1], [1], [2], [0, 0, 0, 1, 1, 2], [0], [0]>} : vector<1x8x8xf32>, vector<1x8x128xf32>, vector<1x8x128xf32> -> vector<1x8x128xf32>
    "tpu.trace_stop"() : () -> ()
    %41 = arith.addf %39, %40 : vector<1x8x128xf32>
    %c0_33 = arith.constant 0 : index
    %c0_34 = arith.constant 0 : index
    %c0_35 = arith.constant 0 : index
    %42 = vector.load %arg17[%c0_33, %c0_34, %c0_35] : memref<1x8x128xf32, #tpu.memory_space<vmem>>, vector<1x8x128xf32>
    tpu.vector_store %arg17[%c0_33, %c0_34, %c0_35], %41 {strides = array<i32>} : memref<1x8x128xf32, #tpu.memory_space<vmem>>, vector<1x8x128xf32>,
    %c0_36 = arith.constant 0 : index
    %c0_37 = arith.constant 0 : index
    %c0_38 = arith.constant 0 : index
    %43 = vector.load %arg15[%c0_36, %c0_37, %c0_38] : memref<1x8x1xf32, #tpu.memory_space<vmem>>, vector<1x8x1xf32>
    tpu.vector_store %arg15[%c0_36, %c0_37, %c0_38], %25 {strides = array<i32>} : memref<1x8x1xf32, #tpu.memory_space<vmem>>, vector<1x8x1xf32>,
    %c0_i32_39 = arith.constant 0 : i32
    %44 = arith.cmpi eq, %arg1, %c0_i32_39 : i32
    %45 = arith.extui %44 : i1 to i32
    %c0_i32_40 = arith.constant 0 : i32
    %46 = arith.cmpi ne, %45, %c0_i32_40 : i32
    scf.if %46 {
      %c0_41 = arith.constant 0 : index
      %c0_42 = arith.constant 0 : index
      %c0_43 = arith.constant 0 : index
      %47 = vector.load %arg16[%c0_41, %c0_42, %c0_43] : memref<1x8x1xf32, #tpu.memory_space<vmem>>, vector<1x8x1xf32>
      %48 = tpu.reciprocal %47 {approx = true} : vector<1x8x1xf32> -> vector<1x8x1xf32>
      %c0_44 = arith.constant 0 : index
      %c0_45 = arith.constant 0 : index
      %c0_46 = arith.constant 0 : index
      %49 = vector.load %arg17[%c0_44, %c0_45, %c0_46] : memref<1x8x128xf32, #tpu.memory_space<vmem>>, vector<1x8x128xf32>
      %50 = vector.broadcast %48 : vector<1x8x1xf32> to vector<1x8x128xf32>
      %51 = arith.mulf %49, %50 : vector<1x8x128xf32>
      %52 = vector.shape_cast %51 : vector<1x8x128xf32> to vector<8x128xf32>
      %c0_47 = arith.constant 0 : index
      %c0_48 = arith.constant 0 : index
      %53 = vector.load %arg11[%c0_47, %c0_48] : memref<128x128xf32, #tpu.memory_space<vmem>>, vector<128x128xf32>
      %cst_49 = arith.constant dense<0.000000e+00> : vector<8x128xf32>
      %54 = tpu.matmul %52, %53, %cst_49 {dimension_numbers = #tpu.dot_dimension_numbers<[1], [0], [0], [1], [0, 0, 1, 1], [], []>} : vector<8x128xf32>, vector<128x128xf32>, vector<8x128xf32> -> vector<8x128xf32>
      %c0_50 = arith.constant 0 : index
      %c0_51 = arith.constant 0 : index
      %55 = vector.load %arg12[%c0_50, %c0_51] : memref<1x128xf32, #tpu.memory_space<vmem>>, vector<1x128xf32>
      %56 = vector.broadcast %55 : vector<1x128xf32> to vector<8x128xf32>
      %57 = arith.addf %54, %56 : vector<8x128xf32>
      %c0_52 = arith.constant 0 : index
      %c0_53 = arith.constant 0 : index
      %58 = vector.load %arg13[%c0_52, %c0_53] : memref<8x128xf32, #tpu.memory_space<vmem>>, vector<8x128xf32>
      tpu.vector_store %arg13[%c0_52, %c0_53], %57 {strides = array<i32>} : memref<8x128xf32, #tpu.memory_space<vmem>>, vector<8x128xf32>,
    } else {
    }
    return
  }
  func.func @transform_0(%arg0: i32, %arg1: i32) -> (i32, i32) {
    %c0_i32 = arith.constant 0 : i32
    %c0_i32_0 = arith.constant 0 : i32
    return %arg0, %c0_i32 : i32, i32
  }
  func.func @transform_1(%arg0: i32, %arg1: i32) -> (i32, i32, i32) {
    %c0_i32 = arith.constant 0 : i32
    %c0_i32_0 = arith.constant 0 : i32
    return %arg0, %arg1, %c0_i32 : i32, i32, i32
  }
  func.func @transform_2(%arg0: i32, %arg1: i32) -> (i32, i32, i32) {
    %c0_i32 = arith.constant 0 : i32
    %c0_i32_0 = arith.constant 0 : i32
    return %arg0, %arg1, %c0_i32 : i32, i32, i32
  }
  func.func @transform_3(%arg0: i32, %arg1: i32) -> (i32, i32) {
    %c0_i32 = arith.constant 0 : i32
    %c0_i32_0 = arith.constant 0 : i32
    %c0_i32_1 = arith.constant 0 : i32
    return %c0_i32, %c0_i32_0 : i32, i32
  }
  func.func @transform_4(%arg0: i32, %arg1: i32) -> (i32, i32) {
    %c0_i32 = arith.constant 0 : i32
    %c0_i32_0 = arith.constant 0 : i32
    %c0_i32_1 = arith.constant 0 : i32
    return %c0_i32, %c0_i32_0 : i32, i32
  }
  func.func @transform_5(%arg0: i32, %arg1: i32) -> (i32, i32) {
    %c0_i32 = arith.constant 0 : i32
    %c0_i32_0 = arith.constant 0 : i32
    %c0_i32_1 = arith.constant 0 : i32
    return %c0_i32, %c0_i32_0 : i32, i32
  }
  func.func @transform_6(%arg0: i32, %arg1: i32) -> (i32, i32) {
    %c0_i32 = arith.constant 0 : i32
    %c0_i32_0 = arith.constant 0 : i32
    %c0_i32_1 = arith.constant 0 : i32
    return %c0_i32, %c0_i32_0 : i32, i32
  }
  func.func @transform_7(%arg0: i32, %arg1: i32) -> (i32, i32) {
    %c0_i32 = arith.constant 0 : i32
    %c0_i32_0 = arith.constant 0 : i32
    %c0_i32_1 = arith.constant 0 : i32
    return %c0_i32, %c0_i32_0 : i32, i32
  }
  func.func @transform_8(%arg0: i32, %arg1: i32) -> (i32, i32) {
    %c0_i32 = arith.constant 0 : i32
    %c0_i32_0 = arith.constant 0 : i32
    %c0_i32_1 = arith.constant 0 : i32
    return %c0_i32, %c0_i32_0 : i32, i32
  }
  func.func @transform_9(%arg0: i32, %arg1: i32) -> (i32, i32) {
    %c0_i32 = arith.constant 0 : i32
    %c0_i32_0 = arith.constant 0 : i32
    %c0_i32_1 = arith.constant 0 : i32
    return %c0_i32, %c0_i32_0 : i32, i32
  }
  func.func @transform_10(%arg0: i32, %arg1: i32) -> (i32, i32) {
    %c0_i32 = arith.constant 0 : i32
    %c0_i32_0 = arith.constant 0 : i32
    %c0_i32_1 = arith.constant 0 : i32
    return %c0_i32, %c0_i32_0 : i32, i32
  }
  func.func @transform_11(%arg0: i32, %arg1: i32) -> (i32, i32) {
    %c0_i32 = arith.constant 0 : i32
    %c0_i32_0 = arith.constant 0 : i32
    return %arg0, %c0_i32 : i32, i32
  }
}

</mosaic_0001>

<llo_original>
// kernel: tpu_custom_call.1
$region0: #{tpu_custom_call.1}
  #allocation0 [shape = 'u32[]', space=smem, size = 0x4, offset = 0x4, fixed_abs, tag = 'smem constant byte address 0x4 - core index']
  #allocation1 [shape = 'u32[72,128]{1,0:T(1,128)}', space=vmem, size = 0x9000, scoped, tag = 'internal scratch']
  #allocation2 [shape = 'f32[8,128]{1,0:T(8,128)}', space=vmem, size = 0x1000, scoped, tag = 'scratch operand']
  #allocation3 [shape = 'f32[1,8,1]{2,1,0:T(8,128)}', space=vmem, size = 0x1000, scoped, tag = 'scratch operand']
  #allocation4 [shape = 'f32[1,8,1]{2,1,0:T(8,128)}', space=vmem, size = 0x1000, scoped, tag = 'scratch operand']
  #allocation5 [shape = 'f32[1,8,128]{2,1,0:T(8,128)}', space=vmem, size = 0x1000, scoped, tag = 'scratch operand']
  %s0 = inlined_call_operand.hbm [shape: f32[16,128], index: 0, kind: input, shape index: {}]
  %s1 = inlined_call_operand.hbm [shape: f32[2,8,128], index: 1, kind: input, shape index: {}]
  %s2 = inlined_call_operand.hbm [shape: f32[2,8,128], index: 2, kind: input, shape index: {}]
  %s3 = inlined_call_operand.hbm [shape: f32[128,128], index: 3, kind: input, shape index: {}]
  %s4 = inlined_call_operand.vmem [shape: f32[1,128], index: 4, kind: input, shape index: {}]
  %s5 = inlined_call_operand.hbm [shape: f32[128,128], index: 5, kind: input, shape index: {}]
  %s6 = inlined_call_operand.vmem [shape: f32[1,128], index: 6, kind: input, shape index: {}]
  %s7 = inlined_call_operand.hbm [shape: f32[128,128], index: 7, kind: input, shape index: {}]
  %s8 = inlined_call_operand.vmem [shape: f32[1,128], index: 8, kind: input, shape index: {}]
  %s9 = inlined_call_operand.hbm [shape: f32[128,128], index: 9, kind: input, shape index: {}]
  %s10 = inlined_call_operand.vmem [shape: f32[1,128], index: 10, kind: input, shape index: {}]
  %s11 = inlined_call_operand.hbm [shape: f32[16,128], index: 11, kind: output, shape index: {}]
  %s12 = sld [smem:[#allocation0]]
  $region113: #{tpu_custom_call.1} parent=0
    _
  %s14 = ssub.s32 1, %s12
  %s15 = scalar_select 0, %s14, %s12
  $region1: #{tpu_custom_call.1} parent=0
    #allocation6 [shape = 'u8[8192]{0}', space=vmem, size = 0x2000, scoped, tag = 'input window, operand 0']
    #allocation7 [shape = 's32[2]{0}', space=sflag, size = 0x8, scoped, tag = 'scoped memory for tpu_custom_call.1']
    #allocation8 [shape = 's32[2]{0}', space=sflag, size = 0x8, scoped, tag = 'scoped memory for tpu_custom_call.1']
    #allocation9 [shape = 'u8[8192]{0}', space=vmem, size = 0x2000, scoped, tag = 'input window, operand 1']
    #allocation10 [shape = 's32[2]{0}', space=sflag, size = 0x8, scoped, tag = 'scoped memory for tpu_custom_call.1']
    #allocation11 [shape = 'u8[8192]{0}', space=vmem, size = 0x2000, scoped, tag = 'input window, operand 2']
    #allocation12 [shape = 'u8[65536]{0}', space=vmem, size = 0x10000, scoped, tag = 'input window, operand 3, single buffered']
    #allocation13 [shape = 's32[1]{0}', space=sflag, size = 0x4, scoped, tag = 'scoped memory for tpu_custom_call.1']
    #allocation14 [shape = 'u8[65536]{0}', space=vmem, size = 0x10000, scoped, tag = 'input window, operand 5, single buffered']
    #allocation15 [shape = 'u8[65536]{0}', space=vmem, size = 0x10000, scoped, tag = 'input window, operand 7, single buffered']
    #allocation16 [shape = 's32[1]{0}', space=sflag, size = 0x4, scoped, tag = 'scoped memory for tpu_custom_call.1']
    #allocation17 [shape = 'u8[65536]{0}', space=vmem, size = 0x10000, scoped, tag = 'input window, operand 9, single buffered']
    #allocation18 [shape = 'u8[8192]{0}', space=vmem, size = 0x2000, scoped, tag = 'output window, operand 0']
    %16 = vsyncpa [#allocation7], 0
    %s17 = scalar_lea.sflag [#allocation7], 1
    %18 = vsyncpa %s17, 0
    %19 = vsyncpa [#allocation10], 0
    %s20 = scalar_lea.sflag [#allocation10], 1
    %21 = vsyncpa %s20, 0
    %22 = vsyncpa [#allocation13], 0
    %23 = vsyncpa [#allocation16], 0
    %24 = vsyncpa [#allocation8], 0
    %s25 = scalar_lea.sflag [#allocation8], 1
    %26 = vsyncpa %s25, 0
    loop: start=0, step=1, limit=4
    $region2: #{tpu_custom_call.1} parent=1 // loop_pre_header
      _
    $region3: #{tpu_custom_call.1} parent=1 // loop_header
      %s28 = sphi 0, %s32
      %p29 = scmp.ge.s32.totalorder %s28, 4
      %s35 = sphi 0, %s47
      %s36 = sphi 0, %s43
      %s37 = sphi 0, %s35
      %s38 = sphi 0, %s36
      %s39 = sphi 0, %s37
      %s40 = sphi 0, %s38
      %s50 = sphi 0, %s52
      %s53 = sphi 0, %s50
      %s54 = sphi 0, %s53
      %s70 = sphi 0, %s54
      %s78 = sphi 0, %s80
      %s81 = sphi 0, %s78
      %s82 = sphi 0, %s81
      %s98 = sphi 0, %s82
      %s106 = sphi 0, %s108
      %s109 = sphi 0, %s106
      %s110 = sphi 0, %s109
      %s126 = sphi 0, %s110
      %s130 = sphi 0, %s130
      %s132 = sphi 0, %s130
      %s133 = sphi 0, %s132
      %s147 = sphi 0, %s133
      %s151 = sphi 0, %s151
      %s153 = sphi 0, %s151
      %s154 = sphi 0, %s153
      %s168 = sphi 0, %s154
      %s172 = sphi 0, %s172
      %s174 = sphi 0, %s172
      %s175 = sphi 0, %s174
      %s189 = sphi 0, %s175
      %s193 = sphi 0, %s193
      %s195 = sphi 0, %s193
      %s196 = sphi 0, %s195
      %s210 = sphi 0, %s196
      %s214 = sphi 0, %s214
      %s216 = sphi 0, %s214
      %s217 = sphi 0, %s216
      %s231 = sphi 0, %s217
      %s235 = sphi 0, %s235
      %s237 = sphi 0, %s235
      %s238 = sphi 0, %s237
      %s252 = sphi 0, %s238
      %s256 = sphi 0, %s256
      %s258 = sphi 0, %s256
      %s259 = sphi 0, %s258
      %s273 = sphi 0, %s259
      %s277 = sphi 0, %s277
      %s279 = sphi 0, %s277
      %s280 = sphi 0, %s279
      %s294 = sphi 0, %s280
      %s300 = sphi 0, %s302
      %s303 = sphi 0, %s300
      %s304 = sphi 0, %s303
      %s320 = sphi 0, %s304
    $region4: #{tpu_custom_call.1} parent=1 // loop_header_branch
      %31 = sbr.rel (%p29) target = $region8
    $region5: #{tpu_custom_call.1} parent=1 // loop_body
      %s33 = ssub.s32 %s28, 1
      %s34 = ssub.s32 %s28, 2
      %s41 = sadd.s32 1, %s36
      %p42 = scmp.ge.s32.totalorder %s41, 1
      %s43 = scalar_select %p42, 0, %s41
      %s44 = sadd.s32 1, %s35
      %s45 = scalar_select %p42, %s44, %s35
      %p46 = scmp.ge.s32.totalorder %s45, 2
      %s47 = scalar_select %p46, 0, %s45
      %s48 = ssub.s32 %s35, %s47
      %p49 = scmp.eq.s32.totalorder %s48, 0
      %s51 = sadd.s32 %s50, 1
      %s52 = scalar_select %p49, %s50, %s51
      %p55 = pneg %p49
      %p56 = scmp.eq.s32.totalorder %s28, 1
      %p57 = por %p55, %p56
      %p58 = scmp.ne.s32.totalorder %s50, %s53
      %p59 = scmp.eq.s32.totalorder %s28, 0
      %p60 = por %p58, %p59
      %p61 = scmp.ne.s32.totalorder %s50, %s53
      %p62 = scmp.eq.s32.totalorder %s33, 1
      %p63 = por %p61, %p62
      %p64 = scmp.ne.s32.totalorder %s53, %s54
      %p65 = scmp.eq.s32.totalorder %s33, 0
      %p66 = por %p64, %p65
      %p67 = scmp.ne.s32.totalorder %s53, %s54
      %p68 = scmp.eq.s32.totalorder %s34, 1
      %p69 = por %p67, %p68
      %p71 = scmp.ne.s32.totalorder %s54, %s70
      %p72 = scmp.eq.s32.totalorder %s34, 0
      %p73 = por %p71, %p72
      %s74 = ssub.s32 %s35, %s47
      %s75 = ssub.s32 %s36, %s43
      %s76 = sor.u32 %s74, %s75
      %p77 = scmp.eq.s32.totalorder %s76, 0
      %s79 = sadd.s32 %s78, 1
      %s80 = scalar_select %p77, %s78, %s79
      %p83 = pneg %p77
      %p84 = scmp.eq.s32.totalorder %s28, 1
      %p85 = por %p83, %p84
      %p86 = scmp.ne.s32.totalorder %s78, %s81
      %p87 = scmp.eq.s32.totalorder %s28, 0
      %p88 = por %p86, %p87
      %p89 = scmp.ne.s32.totalorder %s78, %s81
      %p90 = scmp.eq.s32.totalorder %s33, 1
      %p91 = por %p89, %p90
      %p92 = scmp.ne.s32.totalorder %s81, %s82
      %p93 = scmp.eq.s32.totalorder %s33, 0
      %p94 = por %p92, %p93
      %p95 = scmp.ne.s32.totalorder %s81, %s82
      %p96 = scmp.eq.s32.totalorder %s34, 1
      %p97 = por %p95, %p96
      %p99 = scmp.ne.s32.totalorder %s82, %s98
      %p100 = scmp.eq.s32.totalorder %s34, 0
      %p101 = por %p99, %p100
      %s102 = ssub.s32 %s35, %s47
      %s103 = ssub.s32 %s36, %s43
      %s104 = sor.u32 %s102, %s103
      %p105 = scmp.eq.s32.totalorder %s104, 0
      %s107 = sadd.s32 %s106, 1
      %s108 = scalar_select %p105, %s106, %s107
      %p111 = pneg %p105
      %p112 = scmp.eq.s32.totalorder %s28, 1
      %p113 = por %p111, %p112
      %p114 = scmp.ne.s32.totalorder %s106, %s109
      %p115 = scmp.eq.s32.totalorder %s28, 0
      %p116 = por %p114, %p115
      %p117 = scmp.ne.s32.totalorder %s106, %s109
      %p118 = scmp.eq.s32.totalorder %s33, 1
      %p119 = por %p117, %p118
      %p120 = scmp.ne.s32.totalorder %s109, %s110
      %p121 = scmp.eq.s32.totalorder %s33, 0
      %p122 = por %p120, %p121
      %p123 = scmp.ne.s32.totalorder %s109, %s110
      %p124 = scmp.eq.s32.totalorder %s34, 1
      %p125 = por %p123, %p124
      %p127 = scmp.ne.s32.totalorder %s110, %s126
      %p128 = scmp.eq.s32.totalorder %s34, 0
      %p129 = por %p127, %p128
      %s131 = sadd.s32 %s130, 1
      %p134 = scmp.eq.s32.totalorder %s28, 1
      %p135 = scmp.ne.s32.totalorder %s130, %s132
      %p136 = scmp.eq.s32.totalorder %s28, 0
      %p137 = por %p135, %p136
      %p138 = scmp.ne.s32.totalorder %s130, %s132
      %p139 = scmp.eq.s32.totalorder %s33, 1
      %p140 = por %p138, %p139
      %p141 = scmp.ne.s32.totalorder %s132, %s133
      %p142 = scmp.eq.s32.totalorder %s33, 0
      %p143 = por %p141, %p142
      %p144 = scmp.ne.s32.totalorder %s132, %s133
      %p145 = scmp.eq.s32.totalorder %s34, 1
      %p146 = por %p144, %p145
      %p148 = scmp.ne.s32.totalorder %s133, %s147
      %p149 = scmp.eq.s32.totalorder %s34, 0
      %p150 = por %p148, %p149
      %s152 = sadd.s32 %s151, 1
      %p155 = scmp.eq.s32.totalorder %s28, 1
      %p156 = scmp.ne.s32.totalorder %s151, %s153
      %p157 = scmp.eq.s32.totalorder %s28, 0
      %p158 = por %p156, %p157
      %p159 = scmp.ne.s32.totalorder %s151, %s153
      %p160 = scmp.eq.s32.totalorder %s33, 1
      %p161 = por %p159, %p160
      %p162 = scmp.ne.s32.totalorder %s153, %s154
      %p163 = scmp.eq.s32.totalorder %s33, 0
      %p164 = por %p162, %p163
      %p165 = scmp.ne.s32.totalorder %s153, %s154
      %p166 = scmp.eq.s32.totalorder %s34, 1
      %p167 = por %p165, %p166
      %p169 = scmp.ne.s32.totalorder %s154, %s168
      %p170 = scmp.eq.s32.totalorder %s34, 0
      %p171 = por %p169, %p170
      %s173 = sadd.s32 %s172, 1
      %p176 = scmp.eq.s32.totalorder %s28, 1
      %p177 = scmp.ne.s32.totalorder %s172, %s174
      %p178 = scmp.eq.s32.totalorder %s28, 0
      %p179 = por %p177, %p178
      %p180 = scmp.ne.s32.totalorder %s172, %s174
      %p181 = scmp.eq.s32.totalorder %s33, 1
      %p182 = por %p180, %p181
      %p183 = scmp.ne.s32.totalorder %s174, %s175
      %p184 = scmp.eq.s32.totalorder %s33, 0
      %p185 = por %p183, %p184
      %p186 = scmp.ne.s32.totalorder %s174, %s175
      %p187 = scmp.eq.s32.totalorder %s34, 1
      %p188 = por %p186, %p187
      %p190 = scmp.ne.s32.totalorder %s175, %s189
      %p191 = scmp.eq.s32.totalorder %s34, 0
      %p192 = por %p190, %p191
      %s194 = sadd.s32 %s193, 1
      %p197 = scmp.eq.s32.totalorder %s28, 1
      %p198 = scmp.ne.s32.totalorder %s193, %s195
      %p199 = scmp.eq.s32.totalorder %s28, 0
      %p200 = por %p198, %p199
      %p201 = scmp.ne.s32.totalorder %s193, %s195
      %p202 = scmp.eq.s32.totalorder %s33, 1
      %p203 = por %p201, %p202
      %p204 = scmp.ne.s32.totalorder %s195, %s196
      %p205 = scmp.eq.s32.totalorder %s33, 0
      %p206 = por %p204, %p205
      %p207 = scmp.ne.s32.totalorder %s195, %s196
      %p208 = scmp.eq.s32.totalorder %s34, 1
      %p209 = por %p207, %p208
      %p211 = scmp.ne.s32.totalorder %s196, %s210
      %p212 = scmp.eq.s32.totalorder %s34, 0
      %p213 = por %p211, %p212
      %s215 = sadd.s32 %s214, 1
      %p218 = scmp.eq.s32.totalorder %s28, 1
      %p219 = scmp.ne.s32.totalorder %s214, %s216
      %p220 = scmp.eq.s32.totalorder %s28, 0
      %p221 = por %p219, %p220
      %p222 = scmp.ne.s32.totalorder %s214, %s216
      %p223 = scmp.eq.s32.totalorder %s33, 1
      %p224 = por %p222, %p223
      %p225 = scmp.ne.s32.totalorder %s216, %s217
      %p226 = scmp.eq.s32.totalorder %s33, 0
      %p227 = por %p225, %p226
      %p228 = scmp.ne.s32.totalorder %s216, %s217
      %p229 = scmp.eq.s32.totalorder %s34, 1
      %p230 = por %p228, %p229
      %p232 = scmp.ne.s32.totalorder %s217, %s231
      %p233 = scmp.eq.s32.totalorder %s34, 0
      %p234 = por %p232, %p233
      %s236 = sadd.s32 %s235, 1
      %p239 = scmp.eq.s32.totalorder %s28, 1
      %p240 = scmp.ne.s32.totalorder %s235, %s237
      %p241 = scmp.eq.s32.totalorder %s28, 0
      %p242 = por %p240, %p241
      %p243 = scmp.ne.s32.totalorder %s235, %s237
      %p244 = scmp.eq.s32.totalorder %s33, 1
      %p245 = por %p243, %p244
      %p246 = scmp.ne.s32.totalorder %s237, %s238
      %p247 = scmp.eq.s32.totalorder %s33, 0
      %p248 = por %p246, %p247
      %p249 = scmp.ne.s32.totalorder %s237, %s238
      %p250 = scmp.eq.s32.totalorder %s34, 1
      %p251 = por %p249, %p250
      %p253 = scmp.ne.s32.totalorder %s238, %s252
      %p254 = scmp.eq.s32.totalorder %s34, 0
      %p255 = por %p253, %p254
      %s257 = sadd.s32 %s256, 1
      %p260 = scmp.eq.s32.totalorder %s28, 1
      %p261 = scmp.ne.s32.totalorder %s256, %s258
      %p262 = scmp.eq.s32.totalorder %s28, 0
      %p263 = por %p261, %p262
      %p264 = scmp.ne.s32.totalorder %s256, %s258
      %p265 = scmp.eq.s32.totalorder %s33, 1
      %p266 = por %p264, %p265
      %p267 = scmp.ne.s32.totalorder %s258, %s259
      %p268 = scmp.eq.s32.totalorder %s33, 0
      %p269 = por %p267, %p268
      %p270 = scmp.ne.s32.totalorder %s258, %s259
      %p271 = scmp.eq.s32.totalorder %s34, 1
      %p272 = por %p270, %p271
      %p274 = scmp.ne.s32.totalorder %s259, %s273
      %p275 = scmp.eq.s32.totalorder %s34, 0
      %p276 = por %p274, %p275
      %s278 = sadd.s32 %s277, 1
      %p281 = scmp.eq.s32.totalorder %s28, 1
      %p282 = scmp.ne.s32.totalorder %s277, %s279
      %p283 = scmp.eq.s32.totalorder %s28, 0
      %p284 = por %p282, %p283
      %p285 = scmp.ne.s32.totalorder %s277, %s279
      %p286 = scmp.eq.s32.totalorder %s33, 1
      %p287 = por %p285, %p286
      %p288 = scmp.ne.s32.totalorder %s279, %s280
      %p289 = scmp.eq.s32.totalorder %s33, 0
      %p290 = por %p288, %p289
      %p291 = scmp.ne.s32.totalorder %s279, %s280
      %p292 = scmp.eq.s32.totalorder %s34, 1
      %p293 = por %p291, %p292
      %p295 = scmp.ne.s32.totalorder %s280, %s294
      %p296 = scmp.eq.s32.totalorder %s34, 0
      %p297 = por %p295, %p296
      %s298 = ssub.s32 %s35, %s47
      %p299 = scmp.eq.s32.totalorder %s298, 0
      %s301 = sadd.s32 %s300, 1
      %s302 = scalar_select %p299, %s300, %s301
      %p305 = pneg %p299
      %p306 = scmp.eq.s32.totalorder %s28, 1
      %p307 = por %p305, %p306
      %p308 = scmp.ne.s32.totalorder %s300, %s303
      %p309 = scmp.eq.s32.totalorder %s28, 0
      %p310 = por %p308, %p309
      %p311 = scmp.ne.s32.totalorder %s300, %s303
      %p312 = scmp.eq.s32.totalorder %s33, 1
      %p313 = por %p311, %p312
      %p314 = scmp.ne.s32.totalorder %s303, %s304
      %p315 = scmp.eq.s32.totalorder %s33, 0
      %p316 = por %p314, %p315
      %p317 = scmp.ne.s32.totalorder %s303, %s304
      %p318 = scmp.eq.s32.totalorder %s34, 1
      %p319 = por %p317, %p318
      %p321 = scmp.ne.s32.totalorder %s304, %s320
      %p322 = scmp.eq.s32.totalorder %s34, 0
      %p323 = por %p321, %p322
      %p324 = scmp.le.s32.totalorder 1, %s28
      %p325 = scmp.lt.s32.totalorder %s28, 3
      %p326 = pnand %p324, %p325
      %p327 = pneg %p326
      // Predicated region
      $region9: #{tpu_custom_call.1} parent=5 // pred_check
        _
      $region10: #{tpu_custom_call.1} parent=5 // pred_check_branch
        %329 = sbr.rel (%p326) target = $region12
      $region11: #{tpu_custom_call.1} parent=5 // pred_region
        %s330 = ssub.s32 %s28, 1
        // Predicated region
        $region13: #{tpu_custom_call.1} parent=11 // pred_check
          %p331 = pneg %p143
        $region14: #{tpu_custom_call.1} parent=11 // pred_check_branch
          %333 = sbr.rel (%p331) target = $region16
        $region15: #{tpu_custom_call.1} parent=11 // pred_region
          %335 = vsyncadd [#allocation13], 0
          %s336 = sshll.u32 %s3, 4
          %s337 = int_to_ptr.hbm [resolvable:$true] %s336
          %s338 = sshll.u32 [#allocation12], 4
          %s339 = int_to_ptr.vmem [resolvable:$true] %s338
          %344 = dma.hbm_to_vmem [thread:$0]  %s337, 2048, %s339, [#allocation13], 128, 128, 8
        $region16: #{tpu_custom_call.1} parent=11 // pred_fallthru
          _
        // Predicated region
        $region17: #{tpu_custom_call.1} parent=11 // pred_check
          %p345 = pneg %p164
        $region18: #{tpu_custom_call.1} parent=11 // pred_check_branch
          %347 = sbr.rel (%p345) target = $region20
        $region19: #{tpu_custom_call.1} parent=11 // pred_region
          _
        $region20: #{tpu_custom_call.1} parent=11 // pred_fallthru
          _
        // Predicated region
        $region21: #{tpu_custom_call.1} parent=11 // pred_check
          %p348 = pneg %p185
        $region22: #{tpu_custom_call.1} parent=11 // pred_check_branch
          %350 = sbr.rel (%p348) target = $region24
        $region23: #{tpu_custom_call.1} parent=11 // pred_region
          %352 = vsyncadd [#allocation13], 0
          %s353 = sshll.u32 %s5, 4
          %s354 = int_to_ptr.hbm [resolvable:$true] %s353
          %s355 = sshll.u32 [#allocation14], 4
          %s356 = int_to_ptr.vmem [resolvable:$true] %s355
          %361 = dma.hbm_to_vmem [thread:$0]  %s354, 2048, %s356, [#allocation13], 128, 128, 8
        $region24: #{tpu_custom_call.1} parent=11 // pred_fallthru
          _
        // Predicated region
        $region25: #{tpu_custom_call.1} parent=11 // pred_check
          %p362 = pneg %p206
        $region26: #{tpu_custom_call.1} parent=11 // pred_check_branch
          %364 = sbr.rel (%p362) target = $region28
        $region27: #{tpu_custom_call.1} parent=11 // pred_region
          _
        $region28: #{tpu_custom_call.1} parent=11 // pred_fallthru
          _
        // Predicated region
        $region29: #{tpu_custom_call.1} parent=11 // pred_check
          %p365 = pneg %p227
        $region30: #{tpu_custom_call.1} parent=11 // pred_check_branch
          %367 = sbr.rel (%p365) target = $region32
        $region31: #{tpu_custom_call.1} parent=11 // pred_region
          %369 = vsyncadd [#allocation16], 0
          %s370 = sshll.u32 %s7, 4
          %s371 = int_to_ptr.hbm [resolvable:$true] %s370
          %s372 = sshll.u32 [#allocation15], 4
          %s373 = int_to_ptr.vmem [resolvable:$true] %s372
          %378 = dma.hbm_to_vmem [thread:$0]  %s371, 2048, %s373, [#allocation16], 128, 128, 8
        $region32: #{tpu_custom_call.1} parent=11 // pred_fallthru
          _
        // Predicated region
        $region33: #{tpu_custom_call.1} parent=11 // pred_check
          %p379 = pneg %p248
        $region34: #{tpu_custom_call.1} parent=11 // pred_check_branch
          %381 = sbr.rel (%p379) target = $region36
        $region35: #{tpu_custom_call.1} parent=11 // pred_region
          _
        $region36: #{tpu_custom_call.1} parent=11 // pred_fallthru
          _
        // Predicated region
        $region37: #{tpu_custom_call.1} parent=11 // pred_check
          %p382 = pneg %p269
        $region38: #{tpu_custom_call.1} parent=11 // pred_check_branch
          %384 = sbr.rel (%p382) target = $region40
        $region39: #{tpu_custom_call.1} parent=11 // pred_region
          %386 = vsyncadd [#allocation16], 0
          %s387 = sshll.u32 %s9, 4
          %s388 = int_to_ptr.hbm [resolvable:$true] %s387
          %s389 = sshll.u32 [#allocation17], 4
          %s390 = int_to_ptr.vmem [resolvable:$true] %s389
          %395 = dma.hbm_to_vmem [thread:$0]  %s388, 2048, %s390, [#allocation16], 128, 128, 8
        $region40: #{tpu_custom_call.1} parent=11 // pred_fallthru
          _
        // Predicated region
        $region41: #{tpu_custom_call.1} parent=11 // pred_check
          %p396 = pneg %p290
        $region42: #{tpu_custom_call.1} parent=11 // pred_check_branch
          %398 = sbr.rel (%p396) target = $region44
        $region43: #{tpu_custom_call.1} parent=11 // pred_region
          _
        $region44: #{tpu_custom_call.1} parent=11 // pred_fallthru
          _
      $region12: #{tpu_custom_call.1} parent=5 // pred_fallthru
        _
      %p399 = scmp.lt.s32.totalorder %s28, 2
      // Predicated region
      $region45: #{tpu_custom_call.1} parent=5 // pred_check
        %p400 = pneg %p399
      $region46: #{tpu_custom_call.1} parent=5 // pred_check_branch
        %402 = sbr.rel (%p400) target = $region48
      $region47: #{tpu_custom_call.1} parent=5 // pred_region
        // Predicated region
        $region49: #{tpu_custom_call.1} parent=47 // pred_check
          %p403 = pneg %p60
        $region50: #{tpu_custom_call.1} parent=47 // pred_check_branch
          %405 = sbr.rel (%p403) target = $region52
        $region51: #{tpu_custom_call.1} parent=47 // pred_region
          %s406 = sand.u32 %s50, 1
          %s407 = scalar_lea.sflag [#allocation7], %s406
          %s408 = sand.u32 %s50, 1
          %s409 = smul.addr %s408, 8
          %s410 = scalar_lea.vmem [#allocation6], %s409
          %412 = vsyncadd %s407, 0
          %s413 = smul.addr %s35, 8
          %s414 = scalar_lea.hbm %s0, %s413
          %s416 = sshll.u32 %s414, 4
          %s417 = int_to_ptr.hbm [resolvable:$true] %s416
          %s418 = sshll.u32 %s410, 4
          %s419 = int_to_ptr.vmem [resolvable:$true] %s418
          %421 = dma.hbm_to_vmem [thread:$0]  %s417, 128, %s419, %s407
        $region52: #{tpu_custom_call.1} parent=47 // pred_fallthru
          _
        // Predicated region
        $region53: #{tpu_custom_call.1} parent=47 // pred_check
          %p422 = pneg %p88
        $region54: #{tpu_custom_call.1} parent=47 // pred_check_branch
          %424 = sbr.rel (%p422) target = $region56
        $region55: #{tpu_custom_call.1} parent=47 // pred_region
          %s425 = sand.u32 %s28, 1
          %s426 = scalar_lea.sflag [#allocation10], %s425
          %s427 = sand.u32 %s78, 1
          %s428 = smul.addr %s427, 8
          %s429 = scalar_lea.vmem [#allocation9], %s428
          %431 = vsyncadd %s426, 0
          %s432 = sadd.s32 %s36, %s35
          %s433 = smul.addr %s432, 8
          %s434 = scalar_lea.hbm %s1, %s433
          %s436 = sshll.u32 %s434, 4
          %s437 = int_to_ptr.hbm [resolvable:$true] %s436
          %s438 = sshll.u32 %s429, 4
          %s439 = int_to_ptr.vmem [resolvable:$true] %s438
          %441 = dma.hbm_to_vmem [thread:$0]  %s437, 128, %s439, %s426
        $region56: #{tpu_custom_call.1} parent=47 // pred_fallthru
          _
        // Predicated region
        $region57: #{tpu_custom_call.1} parent=47 // pred_check
          %p442 = pneg %p116
        $region58: #{tpu_custom_call.1} parent=47 // pred_check_branch
          %444 = sbr.rel (%p442) target = $region60
        $region59: #{tpu_custom_call.1} parent=47 // pred_region
          %s445 = sand.u32 %s28, 1
          %s446 = scalar_lea.sflag [#allocation10], %s445
          %s447 = sand.u32 %s106, 1
          %s448 = smul.addr %s447, 8
          %s449 = scalar_lea.vmem [#allocation11], %s448
          %451 = vsyncadd %s446, 0
          %s452 = sadd.s32 %s36, %s35
          %s453 = smul.addr %s452, 8
          %s454 = scalar_lea.hbm %s2, %s453
          %s456 = sshll.u32 %s454, 4
          %s457 = int_to_ptr.hbm [resolvable:$true] %s456
          %s458 = sshll.u32 %s449, 4
          %s459 = int_to_ptr.vmem [resolvable:$true] %s458
          %461 = dma.hbm_to_vmem [thread:$0]  %s457, 128, %s459, %s446
        $region60: #{tpu_custom_call.1} parent=47 // pred_fallthru
          _
      $region48: #{tpu_custom_call.1} parent=5 // pred_fallthru
        _
      %p462 = scmp.le.s32.totalorder 1, %s28
      %p463 = scmp.lt.s32.totalorder %s28, 3
      %p464 = pnand %p462, %p463
      %p465 = pneg %p464
      // Predicated region
      $region61: #{tpu_custom_call.1} parent=5 // pred_check
        _
      $region62: #{tpu_custom_call.1} parent=5 // pred_check_branch
        %467 = sbr.rel (%p464) target = $region64
      $region63: #{tpu_custom_call.1} parent=5 // pred_region
        %s468 = ssub.s32 %s28, 1
        %s469 = sand.u32 %s53, 1
        %s470 = scalar_lea.sflag [#allocation7], %s469
        %s471 = sand.u32 %s53, 1
        %s472 = smul.addr %s471, 8
        %s473 = scalar_lea.vmem [#allocation6], %s472
        // Predicated region
        $region65: #{tpu_custom_call.1} parent=63 // pred_check
          %p474 = pneg %p66
        $region66: #{tpu_custom_call.1} parent=63 // pred_check_branch
          %476 = sbr.rel (%p474) target = $region68
        $region67: #{tpu_custom_call.1} parent=63 // pred_region
          %478 = dma.done %s470, 128
        $region68: #{tpu_custom_call.1} parent=63 // pred_fallthru
          _
        %s479 = sand.u32 %s33, 1
        %s480 = scalar_lea.sflag [#allocation10], %s479
        %s481 = sand.u32 %s81, 1
        %s482 = smul.addr %s481, 8
        %s483 = scalar_lea.vmem [#allocation9], %s482
        // Predicated region
        $region69: #{tpu_custom_call.1} parent=63 // pred_check
          %p484 = pneg %p94
        $region70: #{tpu_custom_call.1} parent=63 // pred_check_branch
          %486 = sbr.rel (%p484) target = $region72
        $region71: #{tpu_custom_call.1} parent=63 // pred_region
          %488 = dma.done %s480, 128
        $region72: #{tpu_custom_call.1} parent=63 // pred_fallthru
          _
        %s489 = sand.u32 %s33, 1
        %s490 = scalar_lea.sflag [#allocation10], %s489
        %s491 = sand.u32 %s109, 1
        %s492 = smul.addr %s491, 8
        %s493 = scalar_lea.vmem [#allocation11], %s492
        // Predicated region
        $region73: #{tpu_custom_call.1} parent=63 // pred_check
          %p494 = pneg %p122
        $region74: #{tpu_custom_call.1} parent=63 // pred_check_branch
          %496 = sbr.rel (%p494) target = $region76
        $region75: #{tpu_custom_call.1} parent=63 // pred_region
          %498 = dma.done %s490, 128
        $region76: #{tpu_custom_call.1} parent=63 // pred_fallthru
          _
        // Predicated region
        $region77: #{tpu_custom_call.1} parent=63 // pred_check
          %p499 = pneg %p143
        $region78: #{tpu_custom_call.1} parent=63 // pred_check_branch
          %501 = sbr.rel (%p499) target = $region80
        $region79: #{tpu_custom_call.1} parent=63 // pred_region
          %503 = dma.done [#allocation13], 2048
        $region80: #{tpu_custom_call.1} parent=63 // pred_fallthru
          _
        // Predicated region
        $region81: #{tpu_custom_call.1} parent=63 // pred_check
          %p504 = pneg %p185
        $region82: #{tpu_custom_call.1} parent=63 // pred_check_branch
          %506 = sbr.rel (%p504) target = $region84
        $region83: #{tpu_custom_call.1} parent=63 // pred_region
          %508 = dma.done [#allocation13], 2048
        $region84: #{tpu_custom_call.1} parent=63 // pred_fallthru
          _
        // Predicated region
        $region85: #{tpu_custom_call.1} parent=63 // pred_check
          %p509 = pneg %p227
        $region86: #{tpu_custom_call.1} parent=63 // pred_check_branch
          %511 = sbr.rel (%p509) target = $region88
        $region87: #{tpu_custom_call.1} parent=63 // pred_region
          %513 = dma.done [#allocation16], 2048
        $region88: #{tpu_custom_call.1} parent=63 // pred_fallthru
          _
        // Predicated region
        $region89: #{tpu_custom_call.1} parent=63 // pred_check
          %p514 = pneg %p269
        $region90: #{tpu_custom_call.1} parent=63 // pred_check_branch
          %516 = sbr.rel (%p514) target = $region92
        $region91: #{tpu_custom_call.1} parent=63 // pred_region
          %518 = dma.done [#allocation16], 2048
        $region92: #{tpu_custom_call.1} parent=63 // pred_fallthru
          _
        %s519 = sand.u32 %s53, 1
        %s520 = scalar_lea.sflag [#allocation7], %s519
        %s521 = sand.u32 %s53, 1
        %s522 = smul.addr %s521, 8
        %s523 = scalar_lea.vmem [#allocation6], %s522
        %p524 = pneg %p66
        %p525 = pneg %p63
        %s526 = sand.u32 %s33, 1
        %s527 = scalar_lea.sflag [#allocation10], %s526
        %s528 = sand.u32 %s81, 1
        %s529 = smul.addr %s528, 8
        %s530 = scalar_lea.vmem [#allocation9], %s529
        %p531 = pneg %p94
        %p532 = pneg %p91
        %s533 = sand.u32 %s33, 1
        %s534 = scalar_lea.sflag [#allocation10], %s533
        %s535 = sand.u32 %s109, 1
        %s536 = smul.addr %s535, 8
        %s537 = scalar_lea.vmem [#allocation11], %s536
        %p538 = pneg %p122
        %p539 = pneg %p119
        %p540 = pneg %p143
        %p541 = pneg %p140
        %p542 = pneg %p164
        %p543 = pneg %p161
        %p544 = pneg %p185
        %p545 = pneg %p182
        %p546 = pneg %p206
        %p547 = pneg %p203
        %p548 = pneg %p227
        %p549 = pneg %p224
        %p550 = pneg %p248
        %p551 = pneg %p245
        %p552 = pneg %p269
        %p553 = pneg %p266
        %p554 = pneg %p290
        %p555 = pneg %p287
        %p556 = pneg %p316
        %p557 = pneg %p313
        %s558 = sand.u32 %s303, 1
        %s559 = scalar_lea.sflag [#allocation8], %s558
        %s560 = sand.u32 %s303, 1
        %s561 = smul.addr %s560, 8
        %s562 = scalar_lea.vmem [#allocation18], %s561
        %p563 = scmp.eq.s32.totalorder %s38, 0
        // Predicated region
        $region93: #{tpu_custom_call.1} parent=63 // pred_check
          %p564 = pneg %p563
        $region94: #{tpu_custom_call.1} parent=63 // pred_check_branch
          %566 = sbr.rel (%p564) target = $region96
        $region95: #{tpu_custom_call.1} parent=63 // pred_region
          %v567 = vld [vmem:[%s473] sm:$0xff]
          %v568 = vld [vmem:[#allocation12] sm:$0xff]
          %v569 = vld [vmem:[#allocation12 + $0x8] sm:$0xff]
          %v570 = vld [vmem:[#allocation12 + $0x10] sm:$0xff]
          %v571 = vld [vmem:[#allocation12 + $0x18] sm:$0xff]
          %v572 = vld [vmem:[#allocation12 + $0x20] sm:$0xff]
          %v573 = vld [vmem:[#allocation12 + $0x28] sm:$0xff]
          %v574 = vld [vmem:[#allocation12 + $0x30] sm:$0xff]
          %v575 = vld [vmem:[#allocation12 + $0x38] sm:$0xff]
          %v576 = vld [vmem:[#allocation12 + $0x40] sm:$0xff]
          %v577 = vld [vmem:[#allocation12 + $0x48] sm:$0xff]
          %v578 = vld [vmem:[#allocation12 + $0x50] sm:$0xff]
          %v579 = vld [vmem:[#allocation12 + $0x58] sm:$0xff]
          %v580 = vld [vmem:[#allocation12 + $0x60] sm:$0xff]
          %v581 = vld [vmem:[#allocation12 + $0x68] sm:$0xff]
          %v582 = vld [vmem:[#allocation12 + $0x70] sm:$0xff]
          %v583 = vld [vmem:[#allocation12 + $0x78] sm:$0xff]
          %v584 = vld [vmem:[%s4] sm:$0x1]
          %v586 = vperm.slane %v584, 0
          %588 = vmatpush.msra.mxu0 %v583
          %589 = vmatpush.msra.mxu0 %v582
          %590 = vmatpush.msra.mxu0 %v581
          %591 = vmatpush.msra.mxu0 %v580
          %592 = vmatpush.msra.mxu0 %v579
          %593 = vmatpush.msra.mxu0 %v578
          %594 = vmatpush.msra.mxu0 %v577
          %595 = vmatpush.msra.mxu0 %v576
          %596 = vmatpush.msra.mxu0 %v575
          %597 = vmatpush.msra.mxu0 %v574
          %598 = vmatpush.msra.mxu0 %v573
          %599 = vmatpush.msra.mxu0 %v572
          %600 = vmatpush.msra.mxu0 %v571
          %601 = vmatpush.msra.mxu0 %v570
          %602 = vmatpush.msra.mxu0 %v569
          %603 = vmatpush.msra.mxu0 %v568
          %604 = vmatmul.f32.gmra.mxu0 %v567
          %v605 = vpop.f32.mrf.mxu0
          %v606 = vadd.f32 %v586, %v605
          %607 = vdwg.mxu0
          %608 = vst [vmem:[#allocation2] sm:$0xff] %v606
          %vm609 = vcmask 7168
          %610 = vst.msk [vmem:[#allocation3] sm:$0xff] %vm609, -inf
          %611 = vst.msk [vmem:[#allocation4] sm:$0xff] %vm609, 0.0
          %612 = vst [vmem:[#allocation5] sm:$0xff] 0.0
        $region96: #{tpu_custom_call.1} parent=63 // pred_fallthru
          _
        %v613 = vld [vmem:[%s483] sm:$0xff]
        %v614 = vld [vmem:[%s493] sm:$0xff]
        %v615 = vld [vmem:[#allocation14] sm:$0xff]
        %v616 = vld [vmem:[#allocation14 + $0x8] sm:$0xff]
        %v617 = vld [vmem:[#allocation14 + $0x10] sm:$0xff]
        %v618 = vld [vmem:[#allocation14 + $0x18] sm:$0xff]
        %v619 = vld [vmem:[#allocation14 + $0x20] sm:$0xff]
        %v620 = vld [vmem:[#allocation14 + $0x28] sm:$0xff]
        %v621 = vld [vmem:[#allocation14 + $0x30] sm:$0xff]
        %v622 = vld [vmem:[#allocation14 + $0x38] sm:$0xff]
        %v623 = vld [vmem:[#allocation14 + $0x40] sm:$0xff]
        %v624 = vld [vmem:[#allocation14 + $0x48] sm:$0xff]
        %v625 = vld [vmem:[#allocation14 + $0x50] sm:$0xff]
        %v626 = vld [vmem:[#allocation14 + $0x58] sm:$0xff]
        %v627 = vld [vmem:[#allocation14 + $0x60] sm:$0xff]
        %v628 = vld [vmem:[#allocation14 + $0x68] sm:$0xff]
        %v629 = vld [vmem:[#allocation14 + $0x70] sm:$0xff]
        %v630 = vld [vmem:[#allocation14 + $0x78] sm:$0xff]
        %v631 = vld [vmem:[%s6] sm:$0x1]
        %v633 = vperm.slane %v631, 0
        %635 = vmatpush.msra.mxu0 %v630
        %636 = vmatpush.msra.mxu0 %v629
        %637 = vmatpush.msra.mxu0 %v628
        %638 = vmatpush.msra.mxu0 %v627
        %639 = vmatpush.msra.mxu0 %v626
        %640 = vmatpush.msra.mxu0 %v625
        %641 = vmatpush.msra.mxu0 %v624
        %642 = vmatpush.msra.mxu0 %v623
        %643 = vmatpush.msra.mxu0 %v622
        %644 = vmatpush.msra.mxu0 %v621
        %645 = vmatpush.msra.mxu0 %v620
        %646 = vmatpush.msra.mxu0 %v619
        %647 = vmatpush.msra.mxu0 %v618
        %648 = vmatpush.msra.mxu0 %v617
        %649 = vmatpush.msra.mxu0 %v616
        %650 = vmatpush.msra.mxu0 %v615
        %651 = vmatmul.f32.gmra.mxu0 %v613
        %v652 = vpop.f32.mrf.mxu0
        %v653 = vadd.f32 %v633, %v652
        %654 = vdwg.mxu0
        %v655 = vld [vmem:[#allocation15] sm:$0xff]
        %v656 = vld [vmem:[#allocation15 + $0x8] sm:$0xff]
        %v657 = vld [vmem:[#allocation15 + $0x10] sm:$0xff]
        %v658 = vld [vmem:[#allocation15 + $0x18] sm:$0xff]
        %v659 = vld [vmem:[#allocation15 + $0x20] sm:$0xff]
        %v660 = vld [vmem:[#allocation15 + $0x28] sm:$0xff]
        %v661 = vld [vmem:[#allocation15 + $0x30] sm:$0xff]
        %v662 = vld [vmem:[#allocation15 + $0x38] sm:$0xff]
        %v663 = vld [vmem:[#allocation15 + $0x40] sm:$0xff]
        %v664 = vld [vmem:[#allocation15 + $0x48] sm:$0xff]
        %v665 = vld [vmem:[#allocation15 + $0x50] sm:$0xff]
        %v666 = vld [vmem:[#allocation15 + $0x58] sm:$0xff]
        %v667 = vld [vmem:[#allocation15 + $0x60] sm:$0xff]
        %v668 = vld [vmem:[#allocation15 + $0x68] sm:$0xff]
        %v669 = vld [vmem:[#allocation15 + $0x70] sm:$0xff]
        %v670 = vld [vmem:[#allocation15 + $0x78] sm:$0xff]
        %v671 = vld [vmem:[%s8] sm:$0x1]
        %v673 = vperm.slane %v671, 0
        %675 = vmatpush.msra.mxu0 %v670
        %676 = vmatpush.msra.mxu0 %v669
        %677 = vmatpush.msra.mxu0 %v668
        %678 = vmatpush.msra.mxu0 %v667
        %679 = vmatpush.msra.mxu0 %v666
        %680 = vmatpush.msra.mxu0 %v665
        %681 = vmatpush.msra.mxu0 %v664
        %682 = vmatpush.msra.mxu0 %v663
        %683 = vmatpush.msra.mxu0 %v662
        %684 = vmatpush.msra.mxu0 %v661
        %685 = vmatpush.msra.mxu0 %v660
        %686 = vmatpush.msra.mxu0 %v659
        %687 = vmatpush.msra.mxu0 %v658
        %688 = vmatpush.msra.mxu0 %v657
        %689 = vmatpush.msra.mxu0 %v656
        %690 = vmatpush.msra.mxu0 %v655
        %691 = vmatmul.f32.gmra.mxu0 %v614
        %v692 = vpop.f32.mrf.mxu0
        %v693 = vadd.f32 %v673, %v692
        %694 = vdwg.mxu0
        %v695 = vld [vmem:[#allocation2] sm:$0xff]
        %696 = vmatpush.xpose.msra.mxu0 0.0
        %697 = vmatpush.xpose.msra.mxu0 0.0
        %698 = vmatpush.xpose.msra.mxu0 0.0
        %699 = vmatpush.xpose.msra.mxu0 0.0
        %700 = vmatpush.xpose.msra.mxu0 0.0
        %701 = vmatpush.xpose.msra.mxu0 0.0
        %702 = vmatpush.xpose.msra.mxu0 0.0
        %703 = vmatpush.xpose.msra.mxu0 0.0
        %704 = vmatpush.xpose.msra.mxu0 0.0
        %705 = vmatpush.xpose.msra.mxu0 0.0
        %706 = vmatpush.xpose.msra.mxu0 0.0
        %707 = vmatpush.xpose.msra.mxu0 0.0
        %708 = vmatpush.xpose.msra.mxu0 0.0
        %709 = vmatpush.xpose.msra.mxu0 0.0
        %710 = vmatpush.xpose.msra.mxu0 0.0
        %711 = vmatpush.xpose.msra.mxu0 %v653
        %712 = vmatmul.f32.gmra.mxu0 %v695
        %v713 = vpop.f32.mrf.mxu0
        %v714 = vadd.f32 0.0, %v713
        %715 = vdwg.mxu0
        %v716 = vld [vmem:[#allocation3] sm:$0xff]
        %vm717 = vcmask 64512
        %v718 = vsel %vm717, %v714, -inf
        %719 = vmax.xlane.f32.xlu0 %v718
        %v720 = vpop.xlane.xlu0 %719
        %v721 = vmax.f32 %v716, %v720
        %v722 = vsub.f32 %v716, %v721
        %v723 = vmul.f32 %v722, 1.442695
        %v724 = vpow.pop %v723
        %726 = vset.pattern.permute.xlu0 0
        %727 = vperm.xlu0 %726, %v721
        %v728 = vpop.permute.xlu0 %727
        %v730 = vsub.f32 %v714, %v728
        %v731 = vmul.f32 %v730, 1.442695
        %v732 = vpow.pop %v731
        %v733 = vld [vmem:[#allocation4] sm:$0xff]
        %v734 = vmul.f32 %v724, %v733
        %v735 = vsel %vm717, %v732, 0.0
        %736 = vadd.xlane.f32.xlu0 %v735
        %v737 = vpop.xlane.xlu0 %736
        %v738 = vadd.f32 %v734, %v737
        %vm739 = vcmask 7168
        %740 = vst.msk [vmem:[#allocation4] sm:$0xff] %vm739, %v738
        %v741 = vld [vmem:[#allocation5] sm:$0xff]
        %743 = vset.pattern.permute.xlu0 0
        %744 = vperm.xlu0 %743, %v724
        %v745 = vpop.permute.xlu0 %744
        %v747 = vmul.f32 %v745, %v741
        %v749 = vsel %vm717, %v732, 0
        %751 = vmatpush.msra.mxu0 0.0
        %752 = vmatpush.msra.mxu0 0.0
        %753 = vmatpush.msra.mxu0 0.0
        %754 = vmatpush.msra.mxu0 0.0
        %755 = vmatpush.msra.mxu0 0.0
        %756 = vmatpush.msra.mxu0 0.0
        %757 = vmatpush.msra.mxu0 0.0
        %758 = vmatpush.msra.mxu0 0.0
        %759 = vmatpush.msra.mxu0 0.0
        %760 = vmatpush.msra.mxu0 0.0
        %761 = vmatpush.msra.mxu0 0.0
        %762 = vmatpush.msra.mxu0 0.0
        %763 = vmatpush.msra.mxu0 0.0
        %764 = vmatpush.msra.mxu0 0.0
        %765 = vmatpush.msra.mxu0 0.0
        %766 = vmatpush.msra.mxu0 %v693
        %767 = vmatmul.f32.gmra.mxu0 %v749
        %v768 = vpop.f32.mrf.mxu0
        %v769 = vadd.f32 0.0, %v768
        %770 = vdwg.mxu0
        %v771 = vadd.f32 %v747, %v769
        %772 = vst [vmem:[#allocation5] sm:$0xff] %v771
        %773 = vst.msk [vmem:[#allocation3] sm:$0xff] %vm739, %v721
        // Predicated region
        $region97: #{tpu_custom_call.1} parent=63 // pred_check
          %p774 = pneg %p563
        $region98: #{tpu_custom_call.1} parent=63 // pred_check_branch
          %776 = sbr.rel (%p774) target = $region100
        $region99: #{tpu_custom_call.1} parent=63 // pred_region
          %v777 = vld [vmem:[#allocation4] sm:$0xff]
          %v778 = vrcp.pop %v777
          %v779 = vld [vmem:[#allocation5] sm:$0xff]
          %781 = vset.pattern.permute.xlu0 0
          %782 = vperm.xlu0 %781, %v778
          %v783 = vpop.permute.xlu0 %782
          %v785 = vmul.f32 %v779, %v783
          %v786 = vld [vmem:[#allocation17] sm:$0xff]
          %v787 = vld [vmem:[#allocation17 + $0x8] sm:$0xff]
          %v788 = vld [vmem:[#allocation17 + $0x10] sm:$0xff]
          %v789 = vld [vmem:[#allocation17 + $0x18] sm:$0xff]
          %v790 = vld [vmem:[#allocation17 + $0x20] sm:$0xff]
          %v791 = vld [vmem:[#allocation17 + $0x28] sm:$0xff]
          %v792 = vld [vmem:[#allocation17 + $0x30] sm:$0xff]
          %v793 = vld [vmem:[#allocation17 + $0x38] sm:$0xff]
          %v794 = vld [vmem:[#allocation17 + $0x40] sm:$0xff]
          %v795 = vld [vmem:[#allocation17 + $0x48] sm:$0xff]
          %v796 = vld [vmem:[#allocation17 + $0x50] sm:$0xff]
          %v797 = vld [vmem:[#allocation17 + $0x58] sm:$0xff]
          %v798 = vld [vmem:[#allocation17 + $0x60] sm:$0xff]
          %v799 = vld [vmem:[#allocation17 + $0x68] sm:$0xff]
          %v800 = vld [vmem:[#allocation17 + $0x70] sm:$0xff]
          %v801 = vld [vmem:[#allocation17 + $0x78] sm:$0xff]
          %v802 = vld [vmem:[%s10] sm:$0x1]
          %v804 = vperm.slane %v802, 0
          %806 = vmatpush.msra.mxu0 %v801
          %807 = vmatpush.msra.mxu0 %v800
          %808 = vmatpush.msra.mxu0 %v799
          %809 = vmatpush.msra.mxu0 %v798
          %810 = vmatpush.msra.mxu0 %v797
          %811 = vmatpush.msra.mxu0 %v796
          %812 = vmatpush.msra.mxu0 %v795
          %813 = vmatpush.msra.mxu0 %v794
          %814 = vmatpush.msra.mxu0 %v793
          %815 = vmatpush.msra.mxu0 %v792
          %816 = vmatpush.msra.mxu0 %v791
          %817 = vmatpush.msra.mxu0 %v790
          %818 = vmatpush.msra.mxu0 %v789
          %819 = vmatpush.msra.mxu0 %v788
          %820 = vmatpush.msra.mxu0 %v787
          %821 = vmatpush.msra.mxu0 %v786
          %822 = vmatmul.f32.gmra.mxu0 %v785
          %v823 = vpop.f32.mrf.mxu0
          %v824 = vadd.f32 %v804, %v823
          %825 = vdwg.mxu0
          %826 = vst [vmem:[%s562] sm:$0xff] %v824
        $region100: #{tpu_custom_call.1} parent=63 // pred_fallthru
          _
        %s827 = sand.u32 %s303, 1
        %s828 = scalar_lea.sflag [#allocation8], %s827
        %s829 = sand.u32 %s303, 1
        %s830 = smul.addr %s829, 8
        %s831 = scalar_lea.vmem [#allocation18], %s830
        // Predicated region
        $region101: #{tpu_custom_call.1} parent=63 // pred_check
          %p832 = pneg %p313
        $region102: #{tpu_custom_call.1} parent=63 // pred_check_branch
          %834 = sbr.rel (%p832) target = $region104
        $region103: #{tpu_custom_call.1} parent=63 // pred_region
          %836 = vsyncadd %s828, 0
          %s837 = smul.addr %s37, 8
          %s838 = scalar_lea.hbm %s11, %s837
          %s840 = sshll.u32 %s831, 4
          %s841 = int_to_ptr.vmem [resolvable:$true] %s840
          %s842 = sshll.u32 %s838, 4
          %s843 = int_to_ptr.hbm [resolvable:$true] %s842
          %845 = dma.vmem_to_hbm [thread:$0]  %s841, 128, %s843, %s828
        $region104: #{tpu_custom_call.1} parent=63 // pred_fallthru
          _
      $region64: #{tpu_custom_call.1} parent=5 // pred_fallthru
        _
      %p846 = scmp.le.s32.totalorder 2, %s28
      // Predicated region
      $region105: #{tpu_custom_call.1} parent=5 // pred_check
        %p847 = pneg %p846
      $region106: #{tpu_custom_call.1} parent=5 // pred_check_branch
        %849 = sbr.rel (%p847) target = $region108
      $region107: #{tpu_custom_call.1} parent=5 // pred_region
        %s850 = ssub.s32 %s28, 2
        // Predicated region
        $region109: #{tpu_custom_call.1} parent=107 // pred_check
          %p851 = pneg %p319
        $region110: #{tpu_custom_call.1} parent=107 // pred_check_branch
          %853 = sbr.rel (%p851) target = $region112
        $region111: #{tpu_custom_call.1} parent=107 // pred_region
          %s854 = sand.u32 %s304, 1
          %s855 = scalar_lea.sflag [#allocation8], %s854
          %s856 = sand.u32 %s304, 1
          %s857 = smul.addr %s856, 8
          %s858 = scalar_lea.vmem [#allocation18], %s857
          %860 = dma.done %s855, 128
        $region112: #{tpu_custom_call.1} parent=107 // pred_fallthru
          _
      $region108: #{tpu_custom_call.1} parent=5 // pred_fallthru
        _
    $region6: #{tpu_custom_call.1} parent=1 // loop_footer
      %s32 = sadd.s32 1, %s28
    $region7: #{tpu_custom_call.1} parent=1 // loop_footer_branch
      %27 = sbr.rel target = $region3
    $region8: #{tpu_custom_call.1} parent=1 // loop_exit
      _
    %861 = vsyncpa [#allocation7], 1
    %s862 = scalar_lea.sflag [#allocation7], 1
    %863 = vsyncpa %s862, 1
    %864 = vsyncpa [#allocation10], 1
    %s865 = scalar_lea.sflag [#allocation10], 1
    %866 = vsyncpa %s865, 1
    %867 = vsyncpa [#allocation13], 1
    %868 = vsyncpa [#allocation16], 1
    %869 = vsyncpa [#allocation8], 1
    %s870 = scalar_lea.sflag [#allocation8], 1
    %871 = vsyncpa %s870, 1

// kernel: tpu_custom_call.1
$region0: #{tpu_custom_call.1}
  #allocation0 [shape = 'u32[]', space=smem, size = 0x4, offset = 0x4, fixed_abs, tag = 'smem constant byte address 0x4 - core index']
  #allocation1 [shape = 'u32[72,128]{1,0:T(1,128)}', space=vmem, size = 0x9000, scoped, tag = 'internal scratch']
  #allocation2 [shape = 'f32[8,128]{1,0:T(8,128)}', space=vmem, size = 0x1000, scoped, tag = 'scratch operand']
  #allocation3 [shape = 'f32[1,8,1]{2,1,0:T(8,128)}', space=vmem, size = 0x1000, scoped, tag = 'scratch operand']
  #allocation4 [shape = 'f32[1,8,1]{2,1,0:T(8,128)}', space=vmem, size = 0x1000, scoped, tag = 'scratch operand']
  #allocation5 [shape = 'f32[1,8,128]{2,1,0:T(8,128)}', space=vmem, size = 0x1000, scoped, tag = 'scratch operand']
  %s0 = inlined_call_operand.hbm [shape: f32[16,128], index: 0, kind: input, shape index: {}]
  %s1 = inlined_call_operand.hbm [shape: f32[2,8,128], index: 1, kind: input, shape index: {}]
  %s2 = inlined_call_operand.hbm [shape: f32[2,8,128], index: 2, kind: input, shape index: {}]
  %s3 = inlined_call_operand.hbm [shape: f32[128,128], index: 3, kind: input, shape index: {}]
  %s4 = inlined_call_operand.vmem [shape: f32[1,128], index: 4, kind: input, shape index: {}]
  %s5 = inlined_call_operand.hbm [shape: f32[128,128], index: 5, kind: input, shape index: {}]
  %s6 = inlined_call_operand.vmem [shape: f32[1,128], index: 6, kind: input, shape index: {}]
  %s7 = inlined_call_operand.hbm [shape: f32[128,128], index: 7, kind: input, shape index: {}]
  %s8 = inlined_call_operand.vmem [shape: f32[1,128], index: 8, kind: input, shape index: {}]
  %s9 = inlined_call_operand.hbm [shape: f32[128,128], index: 9, kind: input, shape index: {}]
  %s10 = inlined_call_operand.vmem [shape: f32[1,128], index: 10, kind: input, shape index: {}]
  %s11 = inlined_call_operand.hbm [shape: f32[16,128], index: 11, kind: output, shape index: {}]
  %s12 = sld [smem:[#allocation0]]
  $region113: #{tpu_custom_call.1} parent=0
    _
  %s14 = ssub.s32 1, %s12
  %s15 = scalar_select 0, %s14, %s12
  $region1: #{tpu_custom_call.1} parent=0
    #allocation6 [shape = 'u8[8192]{0}', space=vmem, size = 0x2000, scoped, tag = 'input window, operand 0']
    #allocation7 [shape = 's32[2]{0}', space=sflag, size = 0x8, scoped, tag = 'scoped memory for tpu_custom_call.1']
    #allocation8 [shape = 's32[2]{0}', space=sflag, size = 0x8, scoped, tag = 'scoped memory for tpu_custom_call.1']
    #allocation9 [shape = 'u8[8192]{0}', space=vmem, size = 0x2000, scoped, tag = 'input window, operand 1']
    #allocation10 [shape = 's32[2]{0}', space=sflag, size = 0x8, scoped, tag = 'scoped memory for tpu_custom_call.1']
    #allocation11 [shape = 'u8[8192]{0}', space=vmem, size = 0x2000, scoped, tag = 'input window, operand 2']
    #allocation12 [shape = 'u8[65536]{0}', space=vmem, size = 0x10000, scoped, tag = 'input window, operand 3, single buffered']
    #allocation13 [shape = 's32[1]{0}', space=sflag, size = 0x4, scoped, tag = 'scoped memory for tpu_custom_call.1']
    #allocation14 [shape = 'u8[65536]{0}', space=vmem, size = 0x10000, scoped, tag = 'input window, operand 5, single buffered']
    #allocation15 [shape = 'u8[65536]{0}', space=vmem, size = 0x10000, scoped, tag = 'input window, operand 7, single buffered']
    #allocation16 [shape = 's32[1]{0}', space=sflag, size = 0x4, scoped, tag = 'scoped memory for tpu_custom_call.1']
    #allocation17 [shape = 'u8[65536]{0}', space=vmem, size = 0x10000, scoped, tag = 'input window, operand 9, single buffered']
    #allocation18 [shape = 'u8[8192]{0}', space=vmem, size = 0x2000, scoped, tag = 'output window, operand 0']
    %16 = vsyncpa [#allocation7], 0
    %s17 = scalar_lea.sflag [#allocation7], 1
    %18 = vsyncpa %s17, 0
    %19 = vsyncpa [#allocation10], 0
    %s20 = scalar_lea.sflag [#allocation10], 1
    %21 = vsyncpa %s20, 0
    %22 = vsyncpa [#allocation13], 0
    %23 = vsyncpa [#allocation16], 0
    %24 = vsyncpa [#allocation8], 0
    %s25 = scalar_lea.sflag [#allocation8], 1
    %26 = vsyncpa %s25, 0
    loop: start=0, step=1, limit=4
    $region2: #{tpu_custom_call.1} parent=1 // loop_pre_header
      _
    $region3: #{tpu_custom_call.1} parent=1 // loop_header
      %s28 = sphi 0, %s32
      %p29 = scmp.ge.s32.totalorder %s28, 4
      %s35 = sphi 0, %s47
      %s36 = sphi 0, %s43
      %s37 = sphi 0, %s35
      %s38 = sphi 0, %s36
      %s39 = sphi 0, %s37
      %s40 = sphi 0, %s38
      %s50 = sphi 0, %s52
      %s53 = sphi 0, %s50
      %s54 = sphi 0, %s53
      %s70 = sphi 0, %s54
      %s78 = sphi 0, %s80
      %s81 = sphi 0, %s78
      %s82 = sphi 0, %s81
      %s98 = sphi 0, %s82
      %s106 = sphi 0, %s108
      %s109 = sphi 0, %s106
      %s110 = sphi 0, %s109
      %s126 = sphi 0, %s110
      %s130 = sphi 0, %s130
      %s132 = sphi 0, %s130
      %s133 = sphi 0, %s132
      %s147 = sphi 0, %s133
      %s151 = sphi 0, %s151
      %s153 = sphi 0, %s151
      %s154 = sphi 0, %s153
      %s168 = sphi 0, %s154
      %s172 = sphi 0, %s172
      %s174 = sphi 0, %s172
      %s175 = sphi 0, %s174
      %s189 = sphi 0, %s175
      %s193 = sphi 0, %s193
      %s195 = sphi 0, %s193
      %s196 = sphi 0, %s195
      %s210 = sphi 0, %s196
      %s214 = sphi 0, %s214
      %s216 = sphi 0, %s214
      %s217 = sphi 0, %s216
      %s231 = sphi 0, %s217
      %s235 = sphi 0, %s235
      %s237 = sphi 0, %s235
      %s238 = sphi 0, %s237
      %s252 = sphi 0, %s238
      %s256 = sphi 0, %s256
      %s258 = sphi 0, %s256
      %s259 = sphi 0, %s258
      %s273 = sphi 0, %s259
      %s277 = sphi 0, %s277
      %s279 = sphi 0, %s277
      %s280 = sphi 0, %s279
      %s294 = sphi 0, %s280
      %s300 = sphi 0, %s302
      %s303 = sphi 0, %s300
      %s304 = sphi 0, %s303
      %s320 = sphi 0, %s304
    $region4: #{tpu_custom_call.1} parent=1 // loop_header_branch
      %31 = sbr.rel (%p29) target = $region8
    $region5: #{tpu_custom_call.1} parent=1 // loop_body
      %s33 = ssub.s32 %s28, 1
      %s34 = ssub.s32 %s28, 2
      %s41 = sadd.s32 1, %s36
      %p42 = scmp.ge.s32.totalorder %s41, 1
      %s43 = scalar_select %p42, 0, %s41
      %s44 = sadd.s32 1, %s35
      %s45 = scalar_select %p42, %s44, %s35
      %p46 = scmp.ge.s32.totalorder %s45, 2
      %s47 = scalar_select %p46, 0, %s45
      %s48 = ssub.s32 %s35, %s47
      %p49 = scmp.eq.s32.totalorder %s48, 0
      %s51 = sadd.s32 %s50, 1
      %s52 = scalar_select %p49, %s50, %s51
      %p55 = pneg %p49
      %p56 = scmp.eq.s32.totalorder %s28, 1
      %p57 = por %p55, %p56
      %p58 = scmp.ne.s32.totalorder %s50, %s53
      %p59 = scmp.eq.s32.totalorder %s28, 0
      %p60 = por %p58, %p59
      %p61 = scmp.ne.s32.totalorder %s50, %s53
      %p62 = scmp.eq.s32.totalorder %s33, 1
      %p63 = por %p61, %p62
      %p64 = scmp.ne.s32.totalorder %s53, %s54
      %p65 = scmp.eq.s32.totalorder %s33, 0
      %p66 = por %p64, %p65
      %p67 = scmp.ne.s32.totalorder %s53, %s54
      %p68 = scmp.eq.s32.totalorder %s34, 1
      %p69 = por %p67, %p68
      %p71 = scmp.ne.s32.totalorder %s54, %s70
      %p72 = scmp.eq.s32.totalorder %s34, 0
      %p73 = por %p71, %p72
      %s74 = ssub.s32 %s35, %s47
      %s75 = ssub.s32 %s36, %s43
      %s76 = sor.u32 %s74, %s75
      %p77 = scmp.eq.s32.totalorder %s76, 0
      %s79 = sadd.s32 %s78, 1
      %s80 = scalar_select %p77, %s78, %s79
      %p83 = pneg %p77
      %p84 = scmp.eq.s32.totalorder %s28, 1
      %p85 = por %p83, %p84
      %p86 = scmp.ne.s32.totalorder %s78, %s81
      %p87 = scmp.eq.s32.totalorder %s28, 0
      %p88 = por %p86, %p87
      %p89 = scmp.ne.s32.totalorder %s78, %s81
      %p90 = scmp.eq.s32.totalorder %s33, 1
      %p91 = por %p89, %p90
      %p92 = scmp.ne.s32.totalorder %s81, %s82
      %p93 = scmp.eq.s32.totalorder %s33, 0
      %p94 = por %p92, %p93
      %p95 = scmp.ne.s32.totalorder %s81, %s82
      %p96 = scmp.eq.s32.totalorder %s34, 1
      %p97 = por %p95, %p96
      %p99 = scmp.ne.s32.totalorder %s82, %s98
      %p100 = scmp.eq.s32.totalorder %s34, 0
      %p101 = por %p99, %p100
      %s102 = ssub.s32 %s35, %s47
      %s103 = ssub.s32 %s36, %s43
      %s104 = sor.u32 %s102, %s103
      %p105 = scmp.eq.s32.totalorder %s104, 0
      %s107 = sadd.s32 %s106, 1
      %s108 = scalar_select %p105, %s106, %s107
      %p111 = pneg %p105
      %p112 = scmp.eq.s32.totalorder %s28, 1
      %p113 = por %p111, %p112
      %p114 = scmp.ne.s32.totalorder %s106, %s109
      %p115 = scmp.eq.s32.totalorder %s28, 0
      %p116 = por %p114, %p115
      %p117 = scmp.ne.s32.totalorder %s106, %s109
      %p118 = scmp.eq.s32.totalorder %s33, 1
      %p119 = por %p117, %p118
      %p120 = scmp.ne.s32.totalorder %s109, %s110
      %p121 = scmp.eq.s32.totalorder %s33, 0
      %p122 = por %p120, %p121
      %p123 = scmp.ne.s32.totalorder %s109, %s110
      %p124 = scmp.eq.s32.totalorder %s34, 1
      %p125 = por %p123, %p124
      %p127 = scmp.ne.s32.totalorder %s110, %s126
      %p128 = scmp.eq.s32.totalorder %s34, 0
      %p129 = por %p127, %p128
      %s131 = sadd.s32 %s130, 1
      %p134 = scmp.eq.s32.totalorder %s28, 1
      %p135 = scmp.ne.s32.totalorder %s130, %s132
      %p136 = scmp.eq.s32.totalorder %s28, 0
      %p137 = por %p135, %p136
      %p138 = scmp.ne.s32.totalorder %s130, %s132
      %p139 = scmp.eq.s32.totalorder %s33, 1
      %p140 = por %p138, %p139
      %p141 = scmp.ne.s32.totalorder %s132, %s133
      %p142 = scmp.eq.s32.totalorder %s33, 0
      %p143 = por %p141, %p142
      %p144 = scmp.ne.s32.totalorder %s132, %s133
      %p145 = scmp.eq.s32.totalorder %s34, 1
      %p146 = por %p144, %p145
      %p148 = scmp.ne.s32.totalorder %s133, %s147
      %p149 = scmp.eq.s32.totalorder %s34, 0
      %p150 = por %p148, %p149
      %s152 = sadd.s32 %s151, 1
      %p155 = scmp.eq.s32.totalorder %s28, 1
      %p156 = scmp.ne.s32.totalorder %s151, %s153
      %p157 = scmp.eq.s32.totalorder %s28, 0
      %p158 = por %p156, %p157
      %p159 = scmp.ne.s32.totalorder %s151, %s153
      %p160 = scmp.eq.s32.totalorder %s33, 1
      %p161 = por %p159, %p160
      %p162 = scmp.ne.s32.totalorder %s153, %s154
      %p163 = scmp.eq.s32.totalorder %s33, 0
      %p164 = por %p162, %p163
      %p165 = scmp.ne.s32.totalorder %s153, %s154
      %p166 = scmp.eq.s32.totalorder %s34, 1
      %p167 = por %p165, %p166
      %p169 = scmp.ne.s32.totalorder %s154, %s168
      %p170 = scmp.eq.s32.totalorder %s34, 0
      %p171 = por %p169, %p170
      %s173 = sadd.s32 %s172, 1
      %p176 = scmp.eq.s32.totalorder %s28, 1
      %p177 = scmp.ne.s32.totalorder %s172, %s174
      %p178 = scmp.eq.s32.totalorder %s28, 0
      %p179 = por %p177, %p178
      %p180 = scmp.ne.s32.totalorder %s172, %s174
      %p181 = scmp.eq.s32.totalorder %s33, 1
      %p182 = por %p180, %p181
      %p183 = scmp.ne.s32.totalorder %s174, %s175
      %p184 = scmp.eq.s32.totalorder %s33, 0
      %p185 = por %p183, %p184
      %p186 = scmp.ne.s32.totalorder %s174, %s175
      %p187 = scmp.eq.s32.totalorder %s34, 1
      %p188 = por %p186, %p187
      %p190 = scmp.ne.s32.totalorder %s175, %s189
      %p191 = scmp.eq.s32.totalorder %s34, 0
      %p192 = por %p190, %p191
      %s194 = sadd.s32 %s193, 1
      %p197 = scmp.eq.s32.totalorder %s28, 1
      %p198 = scmp.ne.s32.totalorder %s193, %s195
      %p199 = scmp.eq.s32.totalorder %s28, 0
      %p200 = por %p198, %p199
      %p201 = scmp.ne.s32.totalorder %s193, %s195
      %p202 = scmp.eq.s32.totalorder %s33, 1
      %p203 = por %p201, %p202
      %p204 = scmp.ne.s32.totalorder %s195, %s196
      %p205 = scmp.eq.s32.totalorder %s33, 0
      %p206 = por %p204, %p205
      %p207 = scmp.ne.s32.totalorder %s195, %s196
      %p208 = scmp.eq.s32.totalorder %s34, 1
      %p209 = por %p207, %p208
      %p211 = scmp.ne.s32.totalorder %s196, %s210
      %p212 = scmp.eq.s32.totalorder %s34, 0
      %p213 = por %p211, %p212
      %s215 = sadd.s32 %s214, 1
      %p218 = scmp.eq.s32.totalorder %s28, 1
      %p219 = scmp.ne.s32.totalorder %s214, %s216
      %p220 = scmp.eq.s32.totalorder %s28, 0
      %p221 = por %p219, %p220
      %p222 = scmp.ne.s32.totalorder %s214, %s216
      %p223 = scmp.eq.s32.totalorder %s33, 1
      %p224 = por %p222, %p223
      %p225 = scmp.ne.s32.totalorder %s216, %s217
      %p226 = scmp.eq.s32.totalorder %s33, 0
      %p227 = por %p225, %p226
      %p228 = scmp.ne.s32.totalorder %s216, %s217
      %p229 = scmp.eq.s32.totalorder %s34, 1
      %p230 = por %p228, %p229
      %p232 = scmp.ne.s32.totalorder %s217, %s231
      %p233 = scmp.eq.s32.totalorder %s34, 0
      %p234 = por %p232, %p233
      %s236 = sadd.s32 %s235, 1
      %p239 = scmp.eq.s32.totalorder %s28, 1
      %p240 = scmp.ne.s32.totalorder %s235, %s237
      %p241 = scmp.eq.s32.totalorder %s28, 0
      %p242 = por %p240, %p241
      %p243 = scmp.ne.s32.totalorder %s235, %s237
      %p244 = scmp.eq.s32.totalorder %s33, 1
      %p245 = por %p243, %p244
      %p246 = scmp.ne.s32.totalorder %s237, %s238
      %p247 = scmp.eq.s32.totalorder %s33, 0
      %p248 = por %p246, %p247
      %p249 = scmp.ne.s32.totalorder %s237, %s238
      %p250 = scmp.eq.s32.totalorder %s34, 1
      %p251 = por %p249, %p250
      %p253 = scmp.ne.s32.totalorder %s238, %s252
      %p254 = scmp.eq.s32.totalorder %s34, 0
      %p255 = por %p253, %p254
      %s257 = sadd.s32 %s256, 1
      %p260 = scmp.eq.s32.totalorder %s28, 1
      %p261 = scmp.ne.s32.totalorder %s256, %s258
      %p262 = scmp.eq.s32.totalorder %s28, 0
      %p263 = por %p261, %p262
      %p264 = scmp.ne.s32.totalorder %s256, %s258
      %p265 = scmp.eq.s32.totalorder %s33, 1
      %p266 = por %p264, %p265
      %p267 = scmp.ne.s32.totalorder %s258, %s259
      %p268 = scmp.eq.s32.totalorder %s33, 0
      %p269 = por %p267, %p268
      %p270 = scmp.ne.s32.totalorder %s258, %s259
      %p271 = scmp.eq.s32.totalorder %s34, 1
      %p272 = por %p270, %p271
      %p274 = scmp.ne.s32.totalorder %s259, %s273
      %p275 = scmp.eq.s32.totalorder %s34, 0
      %p276 = por %p274, %p275
      %s278 = sadd.s32 %s277, 1
      %p281 = scmp.eq.s32.totalorder %s28, 1
      %p282 = scmp.ne.s32.totalorder %s277, %s279
      %p283 = scmp.eq.s32.totalorder %s28, 0
      %p284 = por %p282, %p283
      %p285 = scmp.ne.s32.totalorder %s277, %s279
      %p286 = scmp.eq.s32.totalorder %s33, 1
      %p287 = por %p285, %p286
      %p288 = scmp.ne.s32.totalorder %s279, %s280
      %p289 = scmp.eq.s32.totalorder %s33, 0
      %p290 = por %p288, %p289
      %p291 = scmp.ne.s32.totalorder %s279, %s280
      %p292 = scmp.eq.s32.totalorder %s34, 1
      %p293 = por %p291, %p292
      %p295 = scmp.ne.s32.totalorder %s280, %s294
      %p296 = scmp.eq.s32.totalorder %s34, 0
      %p297 = por %p295, %p296
      %s298 = ssub.s32 %s35, %s47
      %p299 = scmp.eq.s32.totalorder %s298, 0
      %s301 = sadd.s32 %s300, 1
      %s302 = scalar_select %p299, %s300, %s301
      %p305 = pneg %p299
      %p306 = scmp.eq.s32.totalorder %s28, 1
      %p307 = por %p305, %p306
      %p308 = scmp.ne.s32.totalorder %s300, %s303
      %p309 = scmp.eq.s32.totalorder %s28, 0
      %p310 = por %p308, %p309
      %p311 = scmp.ne.s32.totalorder %s300, %s303
      %p312 = scmp.eq.s32.totalorder %s33, 1
      %p313 = por %p311, %p312
      %p314 = scmp.ne.s32.totalorder %s303, %s304
      %p315 = scmp.eq.s32.totalorder %s33, 0
      %p316 = por %p314, %p315
      %p317 = scmp.ne.s32.totalorder %s303, %s304
      %p318 = scmp.eq.s32.totalorder %s34, 1
      %p319 = por %p317, %p318
      %p321 = scmp.ne.s32.totalorder %s304, %s320
      %p322 = scmp.eq.s32.totalorder %s34, 0
      %p323 = por %p321, %p322
      %p324 = scmp.le.s32.totalorder 1, %s28
      %p325 = scmp.lt.s32.totalorder %s28, 3
      %p326 = pnand %p324, %p325
      %p327 = pneg %p326
      // Predicated region
      $region9: #{tpu_custom_call.1} parent=5 // pred_check
        _
      $region10: #{tpu_custom_call.1} parent=5 // pred_check_branch
        %329 = sbr.rel (%p326) target = $region12
      $region11: #{tpu_custom_call.1} parent=5 // pred_region
        %s330 = ssub.s32 %s28, 1
        // Predicated region
        $region13: #{tpu_custom_call.1} parent=11 // pred_check
          %p331 = pneg %p143
        $region14: #{tpu_custom_call.1} parent=11 // pred_check_branch
          %333 = sbr.rel (%p331) target = $region16
        $region15: #{tpu_custom_call.1} parent=11 // pred_region
          %335 = vsyncadd [#allocation13], 0
          %s336 = sshll.u32 %s3, 4
          %s337 = int_to_ptr.hbm [resolvable:$true] %s336
          %s338 = sshll.u32 [#allocation12], 4
          %s339 = int_to_ptr.vmem [resolvable:$true] %s338
          %344 = dma.hbm_to_vmem [thread:$0]  %s337, 2048, %s339, [#allocation13], 128, 128, 8
        $region16: #{tpu_custom_call.1} parent=11 // pred_fallthru
          _
        // Predicated region
        $region17: #{tpu_custom_call.1} parent=11 // pred_check
          %p345 = pneg %p164
        $region18: #{tpu_custom_call.1} parent=11 // pred_check_branch
          %347 = sbr.rel (%p345) target = $region20
        $region19: #{tpu_custom_call.1} parent=11 // pred_region
          _
        $region20: #{tpu_custom_call.1} parent=11 // pred_fallthru
          _
        // Predicated region
        $region21: #{tpu_custom_call.1} parent=11 // pred_check
          %p348 = pneg %p185
        $region22: #{tpu_custom_call.1} parent=11 // pred_check_branch
          %350 = sbr.rel (%p348) target = $region24
        $region23: #{tpu_custom_call.1} parent=11 // pred_region
          %352 = vsyncadd [#allocation13], 0
          %s353 = sshll.u32 %s5, 4
          %s354 = int_to_ptr.hbm [resolvable:$true] %s353
          %s355 = sshll.u32 [#allocation14], 4
          %s356 = int_to_ptr.vmem [resolvable:$true] %s355
          %361 = dma.hbm_to_vmem [thread:$0]  %s354, 2048, %s356, [#allocation13], 128, 128, 8
        $region24: #{tpu_custom_call.1} parent=11 // pred_fallthru
          _
        // Predicated region
        $region25: #{tpu_custom_call.1} parent=11 // pred_check
          %p362 = pneg %p206
        $region26: #{tpu_custom_call.1} parent=11 // pred_check_branch
          %364 = sbr.rel (%p362) target = $region28
        $region27: #{tpu_custom_call.1} parent=11 // pred_region
          _
        $region28: #{tpu_custom_call.1} parent=11 // pred_fallthru
          _
        // Predicated region
        $region29: #{tpu_custom_call.1} parent=11 // pred_check
          %p365 = pneg %p227
        $region30: #{tpu_custom_call.1} parent=11 // pred_check_branch
          %367 = sbr.rel (%p365) target = $region32
        $region31: #{tpu_custom_call.1} parent=11 // pred_region
          %369 = vsyncadd [#allocation16], 0
          %s370 = sshll.u32 %s7, 4
          %s371 = int_to_ptr.hbm [resolvable:$true] %s370
          %s372 = sshll.u32 [#allocation15], 4
          %s373 = int_to_ptr.vmem [resolvable:$true] %s372
          %378 = dma.hbm_to_vmem [thread:$0]  %s371, 2048, %s373, [#allocation16], 128, 128, 8
        $region32: #{tpu_custom_call.1} parent=11 // pred_fallthru
          _
        // Predicated region
        $region33: #{tpu_custom_call.1} parent=11 // pred_check
          %p379 = pneg %p248
        $region34: #{tpu_custom_call.1} parent=11 // pred_check_branch
          %381 = sbr.rel (%p379) target = $region36
        $region35: #{tpu_custom_call.1} parent=11 // pred_region
          _
        $region36: #{tpu_custom_call.1} parent=11 // pred_fallthru
          _
        // Predicated region
        $region37: #{tpu_custom_call.1} parent=11 // pred_check
          %p382 = pneg %p269
        $region38: #{tpu_custom_call.1} parent=11 // pred_check_branch
          %384 = sbr.rel (%p382) target = $region40
        $region39: #{tpu_custom_call.1} parent=11 // pred_region
          %386 = vsyncadd [#allocation16], 0
          %s387 = sshll.u32 %s9, 4
          %s388 = int_to_ptr.hbm [resolvable:$true] %s387
          %s389 = sshll.u32 [#allocation17], 4
          %s390 = int_to_ptr.vmem [resolvable:$true] %s389
          %395 = dma.hbm_to_vmem [thread:$0]  %s388, 2048, %s390, [#allocation16], 128, 128, 8
        $region40: #{tpu_custom_call.1} parent=11 // pred_fallthru
          _
        // Predicated region
        $region41: #{tpu_custom_call.1} parent=11 // pred_check
          %p396 = pneg %p290
        $region42: #{tpu_custom_call.1} parent=11 // pred_check_branch
          %398 = sbr.rel (%p396) target = $region44
        $region43: #{tpu_custom_call.1} parent=11 // pred_region
          _
        $region44: #{tpu_custom_call.1} parent=11 // pred_fallthru
          _
      $region12: #{tpu_custom_call.1} parent=5 // pred_fallthru
        _
      %p399 = scmp.lt.s32.totalorder %s28, 2
      // Predicated region
      $region45: #{tpu_custom_call.1} parent=5 // pred_check
        %p400 = pneg %p399
      $region46: #{tpu_custom_call.1} parent=5 // pred_check_branch
        %402 = sbr.rel (%p400) target = $region48
      $region47: #{tpu_custom_call.1} parent=5 // pred_region
        // Predicated region
        $region49: #{tpu_custom_call.1} parent=47 // pred_check
          %p403 = pneg %p60
        $region50: #{tpu_custom_call.1} parent=47 // pred_check_branch
          %405 = sbr.rel (%p403) target = $region52
        $region51: #{tpu_custom_call.1} parent=47 // pred_region
          %s406 = sand.u32 %s50, 1
          %s407 = scalar_lea.sflag [#allocation7], %s406
          %s408 = sand.u32 %s50, 1
          %s409 = smul.addr %s408, 8
          %s410 = scalar_lea.vmem [#allocation6], %s409
          %412 = vsyncadd %s407, 0
          %s413 = smul.addr %s35, 8
          %s414 = scalar_lea.hbm %s0, %s413
          %s416 = sshll.u32 %s414, 4
          %s417 = int_to_ptr.hbm [resolvable:$true] %s416
          %s418 = sshll.u32 %s410, 4
          %s419 = int_to_ptr.vmem [resolvable:$true] %s418
          %421 = dma.hbm_to_vmem [thread:$0]  %s417, 128, %s419, %s407
        $region52: #{tpu_custom_call.1} parent=47 // pred_fallthru
          _
        // Predicated region
        $region53: #{tpu_custom_call.1} parent=47 // pred_check
          %p422 = pneg %p88
        $region54: #{tpu_custom_call.1} parent=47 // pred_check_branch
          %424 = sbr.rel (%p422) target = $region56
        $region55: #{tpu_custom_call.1} parent=47 // pred_region
          %s425 = sand.u32 %s28, 1
          %s426 = scalar_lea.sflag [#allocation10], %s425
          %s427 = sand.u32 %s78, 1
          %s428 = smul.addr %s427, 8
          %s429 = scalar_lea.vmem [#allocation9], %s428
          %431 = vsyncadd %s426, 0
          %s432 = sadd.s32 %s36, %s35
          %s433 = smul.addr %s432, 8
          %s434 = scalar_lea.hbm %s1, %s433
          %s436 = sshll.u32 %s434, 4
          %s437 = int_to_ptr.hbm [resolvable:$true] %s436
          %s438 = sshll.u32 %s429, 4
          %s439 = int_to_ptr.vmem [resolvable:$true] %s438
          %441 = dma.hbm_to_vmem [thread:$0]  %s437, 128, %s439, %s426
        $region56: #{tpu_custom_call.1} parent=47 // pred_fallthru
          _
        // Predicated region
        $region57: #{tpu_custom_call.1} parent=47 // pred_check
          %p442 = pneg %p116
        $region58: #{tpu_custom_call.1} parent=47 // pred_check_branch
          %444 = sbr.rel (%p442) target = $region60
        $region59: #{tpu_custom_call.1} parent=47 // pred_region
          %s445 = sand.u32 %s28, 1
          %s446 = scalar_lea.sflag [#allocation10], %s445
          %s447 = sand.u32 %s106, 1
          %s448 = smul.addr %s447, 8
          %s449 = scalar_lea.vmem [#allocation11], %s448
          %451 = vsyncadd %s446, 0
          %s452 = sadd.s32 %s36, %s35
          %s453 = smul.addr %s452, 8
          %s454 = scalar_lea.hbm %s2, %s453
          %s456 = sshll.u32 %s454, 4
          %s457 = int_to_ptr.hbm [resolvable:$true] %s456
          %s458 = sshll.u32 %s449, 4
          %s459 = int_to_ptr.vmem [resolvable:$true] %s458
          %461 = dma.hbm_to_vmem [thread:$0]  %s457, 128, %s459, %s446
        $region60: #{tpu_custom_call.1} parent=47 // pred_fallthru
          _
      $region48: #{tpu_custom_call.1} parent=5 // pred_fallthru
        _
      %p462 = scmp.le.s32.totalorder 1, %s28
      %p463 = scmp.lt.s32.totalorder %s28, 3
      %p464 = pnand %p462, %p463
      %p465 = pneg %p464
      // Predicated region
      $region61: #{tpu_custom_call.1} parent=5 // pred_check
        _
      $region62: #{tpu_custom_call.1} parent=5 // pred_check_branch
        %467 = sbr.rel (%p464) target = $region64
      $region63: #{tpu_custom_call.1} parent=5 // pred_region
        %s468 = ssub.s32 %s28, 1
        %s469 = sand.u32 %s53, 1
        %s470 = scalar_lea.sflag [#allocation7], %s469
        %s471 = sand.u32 %s53, 1
        %s472 = smul.addr %s471, 8
        %s473 = scalar_lea.vmem [#allocation6], %s472
        // Predicated region
        $region65: #{tpu_custom_call.1} parent=63 // pred_check
          %p474 = pneg %p66
        $region66: #{tpu_custom_call.1} parent=63 // pred_check_branch
          %476 = sbr.rel (%p474) target = $region68
        $region67: #{tpu_custom_call.1} parent=63 // pred_region
          %478 = dma.done %s470, 128
        $region68: #{tpu_custom_call.1} parent=63 // pred_fallthru
          _
        %s479 = sand.u32 %s33, 1
        %s480 = scalar_lea.sflag [#allocation10], %s479
        %s481 = sand.u32 %s81, 1
        %s482 = smul.addr %s481, 8
        %s483 = scalar_lea.vmem [#allocation9], %s482
        // Predicated region
        $region69: #{tpu_custom_call.1} parent=63 // pred_check
          %p484 = pneg %p94
        $region70: #{tpu_custom_call.1} parent=63 // pred_check_branch
          %486 = sbr.rel (%p484) target = $region72
        $region71: #{tpu_custom_call.1} parent=63 // pred_region
          %488 = dma.done %s480, 128
        $region72: #{tpu_custom_call.1} parent=63 // pred_fallthru
          _
        %s489 = sand.u32 %s33, 1
        %s490 = scalar_lea.sflag [#allocation10], %s489
        %s491 = sand.u32 %s109, 1
        %s492 = smul.addr %s491, 8
        %s493 = scalar_lea.vmem [#allocation11], %s492
        // Predicated region
        $region73: #{tpu_custom_call.1} parent=63 // pred_check
          %p494 = pneg %p122
        $region74: #{tpu_custom_call.1} parent=63 // pred_check_branch
          %496 = sbr.rel (%p494) target = $region76
        $region75: #{tpu_custom_call.1} parent=63 // pred_region
          %498 = dma.done %s490, 128
        $region76: #{tpu_custom_call.1} parent=63 // pred_fallthru
          _
        // Predicated region
        $region77: #{tpu_custom_call.1} parent=63 // pred_check
          %p499 = pneg %p143
        $region78: #{tpu_custom_call.1} parent=63 // pred_check_branch
          %501 = sbr.rel (%p499) target = $region80
        $region79: #{tpu_custom_call.1} parent=63 // pred_region
          %503 = dma.done [#allocation13], 2048
        $region80: #{tpu_custom_call.1} parent=63 // pred_fallthru
          _
        // Predicated region
        $region81: #{tpu_custom_call.1} parent=63 // pred_check
          %p504 = pneg %p185
        $region82: #{tpu_custom_call.1} parent=63 // pred_check_branch
          %506 = sbr.rel (%p504) target = $region84
        $region83: #{tpu_custom_call.1} parent=63 // pred_region
          %508 = dma.done [#allocation13], 2048
        $region84: #{tpu_custom_call.1} parent=63 // pred_fallthru
          _
        // Predicated region
        $region85: #{tpu_custom_call.1} parent=63 // pred_check
          %p509 = pneg %p227
        $region86: #{tpu_custom_call.1} parent=63 // pred_check_branch
          %511 = sbr.rel (%p509) target = $region88
        $region87: #{tpu_custom_call.1} parent=63 // pred_region
          %513 = dma.done [#allocation16], 2048
        $region88: #{tpu_custom_call.1} parent=63 // pred_fallthru
          _
        // Predicated region
        $region89: #{tpu_custom_call.1} parent=63 // pred_check
          %p514 = pneg %p269
        $region90: #{tpu_custom_call.1} parent=63 // pred_check_branch
          %516 = sbr.rel (%p514) target = $region92
        $region91: #{tpu_custom_call.1} parent=63 // pred_region
          %518 = dma.done [#allocation16], 2048
        $region92: #{tpu_custom_call.1} parent=63 // pred_fallthru
          _
        %s519 = sand.u32 %s53, 1
        %s520 = scalar_lea.sflag [#allocation7], %s519
        %s521 = sand.u32 %s53, 1
        %s522 = smul.addr %s521, 8
        %s523 = scalar_lea.vmem [#allocation6], %s522
        %p524 = pneg %p66
        %p525 = pneg %p63
        %s526 = sand.u32 %s33, 1
        %s527 = scalar_lea.sflag [#allocation10], %s526
        %s528 = sand.u32 %s81, 1
        %s529 = smul.addr %s528, 8
        %s530 = scalar_lea.vmem [#allocation9], %s529
        %p531 = pneg %p94
        %p532 = pneg %p91
        %s533 = sand.u32 %s33, 1
        %s534 = scalar_lea.sflag [#allocation10], %s533
        %s535 = sand.u32 %s109, 1
        %s536 = smul.addr %s535, 8
        %s537 = scalar_lea.vmem [#allocation11], %s536
        %p538 = pneg %p122
        %p539 = pneg %p119
        %p540 = pneg %p143
        %p541 = pneg %p140
        %p542 = pneg %p164
        %p543 = pneg %p161
        %p544 = pneg %p185
        %p545 = pneg %p182
        %p546 = pneg %p206
        %p547 = pneg %p203
        %p548 = pneg %p227
        %p549 = pneg %p224
        %p550 = pneg %p248
        %p551 = pneg %p245
        %p552 = pneg %p269
        %p553 = pneg %p266
        %p554 = pneg %p290
        %p555 = pneg %p287
        %p556 = pneg %p316
        %p557 = pneg %p313
        %s558 = sand.u32 %s303, 1
        %s559 = scalar_lea.sflag [#allocation8], %s558
        %s560 = sand.u32 %s303, 1
        %s561 = smul.addr %s560, 8
        %s562 = scalar_lea.vmem [#allocation18], %s561
        %p563 = scmp.eq.s32.totalorder %s38, 0
        // Predicated region
        $region93: #{tpu_custom_call.1} parent=63 // pred_check
          %p564 = pneg %p563
        $region94: #{tpu_custom_call.1} parent=63 // pred_check_branch
          %566 = sbr.rel (%p564) target = $region96
        $region95: #{tpu_custom_call.1} parent=63 // pred_region
          %v567 = vld [vmem:[%s473] sm:$0xff]
          %v568 = vld [vmem:[#allocation12] sm:$0xff]
          %v569 = vld [vmem:[#allocation12 + $0x8] sm:$0xff]
          %v570 = vld [vmem:[#allocation12 + $0x10] sm:$0xff]
          %v571 = vld [vmem:[#allocation12 + $0x18] sm:$0xff]
          %v572 = vld [vmem:[#allocation12 + $0x20] sm:$0xff]
          %v573 = vld [vmem:[#allocation12 + $0x28] sm:$0xff]
          %v574 = vld [vmem:[#allocation12 + $0x30] sm:$0xff]
          %v575 = vld [vmem:[#allocation12 + $0x38] sm:$0xff]
          %v576 = vld [vmem:[#allocation12 + $0x40] sm:$0xff]
          %v577 = vld [vmem:[#allocation12 + $0x48] sm:$0xff]
          %v578 = vld [vmem:[#allocation12 + $0x50] sm:$0xff]
          %v579 = vld [vmem:[#allocation12 + $0x58] sm:$0xff]
          %v580 = vld [vmem:[#allocation12 + $0x60] sm:$0xff]
          %v581 = vld [vmem:[#allocation12 + $0x68] sm:$0xff]
          %v582 = vld [vmem:[#allocation12 + $0x70] sm:$0xff]
          %v583 = vld [vmem:[#allocation12 + $0x78] sm:$0xff]
          %v584 = vld [vmem:[%s4] sm:$0x1]
          %v586 = vperm.slane %v584, 0
          %588 = vmatpush.msra.mxu0 %v583
          %589 = vmatpush.msra.mxu0 %v582
          %590 = vmatpush.msra.mxu0 %v581
          %591 = vmatpush.msra.mxu0 %v580
          %592 = vmatpush.msra.mxu0 %v579
          %593 = vmatpush.msra.mxu0 %v578
          %594 = vmatpush.msra.mxu0 %v577
          %595 = vmatpush.msra.mxu0 %v576
          %596 = vmatpush.msra.mxu0 %v575
          %597 = vmatpush.msra.mxu0 %v574
          %598 = vmatpush.msra.mxu0 %v573
          %599 = vmatpush.msra.mxu0 %v572
          %600 = vmatpush.msra.mxu0 %v571
          %601 = vmatpush.msra.mxu0 %v570
          %602 = vmatpush.msra.mxu0 %v569
          %603 = vmatpush.msra.mxu0 %v568
          %604 = vmatmul.f32.gmra.mxu0 %v567
          %v605 = vpop.f32.mrf.mxu0
          %v606 = vadd.f32 %v586, %v605
          %607 = vdwg.mxu0
          %608 = vst [vmem:[#allocation2] sm:$0xff] %v606
          %vm609 = vcmask 7168
          %610 = vst.msk [vmem:[#allocation3] sm:$0xff] %vm609, -inf
          %611 = vst.msk [vmem:[#allocation4] sm:$0xff] %vm609, 0.0
          %612 = vst [vmem:[#allocation5] sm:$0xff] 0.0
        $region96: #{tpu_custom_call.1} parent=63 // pred_fallthru
          _
        %v613 = vld [vmem:[%s483] sm:$0xff]
        %v614 = vld [vmem:[%s493] sm:$0xff]
        %v615 = vld [vmem:[#allocation14] sm:$0xff]
        %v616 = vld [vmem:[#allocation14 + $0x8] sm:$0xff]
        %v617 = vld [vmem:[#allocation14 + $0x10] sm:$0xff]
        %v618 = vld [vmem:[#allocation14 + $0x18] sm:$0xff]
        %v619 = vld [vmem:[#allocation14 + $0x20] sm:$0xff]
        %v620 = vld [vmem:[#allocation14 + $0x28] sm:$0xff]
        %v621 = vld [vmem:[#allocation14 + $0x30] sm:$0xff]
        %v622 = vld [vmem:[#allocation14 + $0x38] sm:$0xff]
        %v623 = vld [vmem:[#allocation14 + $0x40] sm:$0xff]
        %v624 = vld [vmem:[#allocation14 + $0x48] sm:$0xff]
        %v625 = vld [vmem:[#allocation14 + $0x50] sm:$0xff]
        %v626 = vld [vmem:[#allocation14 + $0x58] sm:$0xff]
        %v627 = vld [vmem:[#allocation14 + $0x60] sm:$0xff]
        %v628 = vld [vmem:[#allocation14 + $0x68] sm:$0xff]
        %v629 = vld [vmem:[#allocation14 + $0x70] sm:$0xff]
        %v630 = vld [vmem:[#allocation14 + $0x78] sm:$0xff]
        %v631 = vld [vmem:[%s6] sm:$0x1]
        %v633 = vperm.slane %v631, 0
        %635 = vmatpush.msra.mxu0 %v630
        %636 = vmatpush.msra.mxu0 %v629
        %637 = vmatpush.msra.mxu0 %v628
        %638 = vmatpush.msra.mxu0 %v627
        %639 = vmatpush.msra.mxu0 %v626
        %640 = vmatpush.msra.mxu0 %v625
        %641 = vmatpush.msra.mxu0 %v624
        %642 = vmatpush.msra.mxu0 %v623
        %643 = vmatpush.msra.mxu0 %v622
        %644 = vmatpush.msra.mxu0 %v621
        %645 = vmatpush.msra.mxu0 %v620
        %646 = vmatpush.msra.mxu0 %v619
        %647 = vmatpush.msra.mxu0 %v618
        %648 = vmatpush.msra.mxu0 %v617
        %649 = vmatpush.msra.mxu0 %v616
        %650 = vmatpush.msra.mxu0 %v615
        %651 = vmatmul.f32.gmra.mxu0 %v613
        %v652 = vpop.f32.mrf.mxu0
        %v653 = vadd.f32 %v633, %v652
        %654 = vdwg.mxu0
        %v655 = vld [vmem:[#allocation15] sm:$0xff]
        %v656 = vld [vmem:[#allocation15 + $0x8] sm:$0xff]
        %v657 = vld [vmem:[#allocation15 + $0x10] sm:$0xff]
        %v658 = vld [vmem:[#allocation15 + $0x18] sm:$0xff]
        %v659 = vld [vmem:[#allocation15 + $0x20] sm:$0xff]
        %v660 = vld [vmem:[#allocation15 + $0x28] sm:$0xff]
        %v661 = vld [vmem:[#allocation15 + $0x30] sm:$0xff]
        %v662 = vld [vmem:[#allocation15 + $0x38] sm:$0xff]
        %v663 = vld [vmem:[#allocation15 + $0x40] sm:$0xff]
        %v664 = vld [vmem:[#allocation15 + $0x48] sm:$0xff]
        %v665 = vld [vmem:[#allocation15 + $0x50] sm:$0xff]
        %v666 = vld [vmem:[#allocation15 + $0x58] sm:$0xff]
        %v667 = vld [vmem:[#allocation15 + $0x60] sm:$0xff]
        %v668 = vld [vmem:[#allocation15 + $0x68] sm:$0xff]
        %v669 = vld [vmem:[#allocation15 + $0x70] sm:$0xff]
        %v670 = vld [vmem:[#allocation15 + $0x78] sm:$0xff]
        %v671 = vld [vmem:[%s8] sm:$0x1]
        %v673 = vperm.slane %v671, 0
        %675 = vmatpush.msra.mxu0 %v670
        %676 = vmatpush.msra.mxu0 %v669
        %677 = vmatpush.msra.mxu0 %v668
        %678 = vmatpush.msra.mxu0 %v667
        %679 = vmatpush.msra.mxu0 %v666
        %680 = vmatpush.msra.mxu0 %v665
        %681 = vmatpush.msra.mxu0 %v664
        %682 = vmatpush.msra.mxu0 %v663
        %683 = vmatpush.msra.mxu0 %v662
        %684 = vmatpush.msra.mxu0 %v661
        %685 = vmatpush.msra.mxu0 %v660
        %686 = vmatpush.msra.mxu0 %v659
        %687 = vmatpush.msra.mxu0 %v658
        %688 = vmatpush.msra.mxu0 %v657
        %689 = vmatpush.msra.mxu0 %v656
        %690 = vmatpush.msra.mxu0 %v655
        %691 = vmatmul.f32.gmra.mxu0 %v614
        %v692 = vpop.f32.mrf.mxu0
        %v693 = vadd.f32 %v673, %v692
        %694 = vdwg.mxu0
        %v695 = vld [vmem:[#allocation2] sm:$0xff]
        %696 = vmatpush.xpose.msra.mxu0 0.0
        %697 = vmatpush.xpose.msra.mxu0 0.0
        %698 = vmatpush.xpose.msra.mxu0 0.0
        %699 = vmatpush.xpose.msra.mxu0 0.0
        %700 = vmatpush.xpose.msra.mxu0 0.0
        %701 = vmatpush.xpose.msra.mxu0 0.0
        %702 = vmatpush.xpose.msra.mxu0 0.0
        %703 = vmatpush.xpose.msra.mxu0 0.0
        %704 = vmatpush.xpose.msra.mxu0 0.0
        %705 = vmatpush.xpose.msra.mxu0 0.0
        %706 = vmatpush.xpose.msra.mxu0 0.0
        %707 = vmatpush.xpose.msra.mxu0 0.0
        %708 = vmatpush.xpose.msra.mxu0 0.0
        %709 = vmatpush.xpose.msra.mxu0 0.0
        %710 = vmatpush.xpose.msra.mxu0 0.0
        %711 = vmatpush.xpose.msra.mxu0 %v653
        %712 = vmatmul.f32.gmra.mxu0 %v695
        %v713 = vpop.f32.mrf.mxu0
        %v714 = vadd.f32 0.0, %v713
        %715 = vdwg.mxu0
        %v716 = vld [vmem:[#allocation3] sm:$0xff]
        %vm717 = vcmask 64512
        %v718 = vsel %vm717, %v714, -inf
        %719 = vmax.xlane.f32.xlu0 %v718
        %v720 = vpop.xlane.xlu0 %719
        %v721 = vmax.f32 %v716, %v720
        %v722 = vsub.f32 %v716, %v721
        %v723 = vmul.f32 %v722, 1.442695
        %v724 = vpow.pop %v723
        %726 = vset.pattern.permute.xlu0 0
        %727 = vperm.xlu0 %726, %v721
        %v728 = vpop.permute.xlu0 %727
        %v730 = vsub.f32 %v714, %v728
        %v731 = vmul.f32 %v730, 1.442695
        %v732 = vpow.pop %v731
        %v733 = vld [vmem:[#allocation4] sm:$0xff]
        %v734 = vmul.f32 %v724, %v733
        %v735 = vsel %vm717, %v732, 0.0
        %736 = vadd.xlane.f32.xlu0 %v735
        %v737 = vpop.xlane.xlu0 %736
        %v738 = vadd.f32 %v734, %v737
        %vm739 = vcmask 7168
        %740 = vst.msk [vmem:[#allocation4] sm:$0xff] %vm739, %v738
        %v741 = vld [vmem:[#allocation5] sm:$0xff]
        %743 = vset.pattern.permute.xlu0 0
        %744 = vperm.xlu0 %743, %v724
        %v745 = vpop.permute.xlu0 %744
        %v747 = vmul.f32 %v745, %v741
        %v749 = vsel %vm717, %v732, 0
        %751 = vmatpush.msra.mxu0 0.0
        %752 = vmatpush.msra.mxu0 0.0
        %753 = vmatpush.msra.mxu0 0.0
        %754 = vmatpush.msra.mxu0 0.0
        %755 = vmatpush.msra.mxu0 0.0
        %756 = vmatpush.msra.mxu0 0.0
        %757 = vmatpush.msra.mxu0 0.0
        %758 = vmatpush.msra.mxu0 0.0
        %759 = vmatpush.msra.mxu0 0.0
        %760 = vmatpush.msra.mxu0 0.0
        %761 = vmatpush.msra.mxu0 0.0
        %762 = vmatpush.msra.mxu0 0.0
        %763 = vmatpush.msra.mxu0 0.0
        %764 = vmatpush.msra.mxu0 0.0
        %765 = vmatpush.msra.mxu0 0.0
        %766 = vmatpush.msra.mxu0 %v693
        %767 = vmatmul.f32.gmra.mxu0 %v749
        %v768 = vpop.f32.mrf.mxu0
        %v769 = vadd.f32 0.0, %v768
        %770 = vdwg.mxu0
        %v771 = vadd.f32 %v747, %v769
        %772 = vst [vmem:[#allocation5] sm:$0xff] %v771
        %773 = vst.msk [vmem:[#allocation3] sm:$0xff] %vm739, %v721
        // Predicated region
        $region97: #{tpu_custom_call.1} parent=63 // pred_check
          %p774 = pneg %p563
        $region98: #{tpu_custom_call.1} parent=63 // pred_check_branch
          %776 = sbr.rel (%p774) target = $region100
        $region99: #{tpu_custom_call.1} parent=63 // pred_region
          %v777 = vld [vmem:[#allocation4] sm:$0xff]
          %v778 = vrcp.pop %v777
          %v779 = vld [vmem:[#allocation5] sm:$0xff]
          %781 = vset.pattern.permute.xlu0 0
          %782 = vperm.xlu0 %781, %v778
          %v783 = vpop.permute.xlu0 %782
          %v785 = vmul.f32 %v779, %v783
          %v786 = vld [vmem:[#allocation17] sm:$0xff]
          %v787 = vld [vmem:[#allocation17 + $0x8] sm:$0xff]
          %v788 = vld [vmem:[#allocation17 + $0x10] sm:$0xff]
          %v789 = vld [vmem:[#allocation17 + $0x18] sm:$0xff]
          %v790 = vld [vmem:[#allocation17 + $0x20] sm:$0xff]
          %v791 = vld [vmem:[#allocation17 + $0x28] sm:$0xff]
          %v792 = vld [vmem:[#allocation17 + $0x30] sm:$0xff]
          %v793 = vld [vmem:[#allocation17 + $0x38] sm:$0xff]
          %v794 = vld [vmem:[#allocation17 + $0x40] sm:$0xff]
          %v795 = vld [vmem:[#allocation17 + $0x48] sm:$0xff]
          %v796 = vld [vmem:[#allocation17 + $0x50] sm:$0xff]
          %v797 = vld [vmem:[#allocation17 + $0x58] sm:$0xff]
          %v798 = vld [vmem:[#allocation17 + $0x60] sm:$0xff]
          %v799 = vld [vmem:[#allocation17 + $0x68] sm:$0xff]
          %v800 = vld [vmem:[#allocation17 + $0x70] sm:$0xff]
          %v801 = vld [vmem:[#allocation17 + $0x78] sm:$0xff]
          %v802 = vld [vmem:[%s10] sm:$0x1]
          %v804 = vperm.slane %v802, 0
          %806 = vmatpush.msra.mxu0 %v801
          %807 = vmatpush.msra.mxu0 %v800
          %808 = vmatpush.msra.mxu0 %v799
          %809 = vmatpush.msra.mxu0 %v798
          %810 = vmatpush.msra.mxu0 %v797
          %811 = vmatpush.msra.mxu0 %v796
          %812 = vmatpush.msra.mxu0 %v795
          %813 = vmatpush.msra.mxu0 %v794
          %814 = vmatpush.msra.mxu0 %v793
          %815 = vmatpush.msra.mxu0 %v792
          %816 = vmatpush.msra.mxu0 %v791
          %817 = vmatpush.msra.mxu0 %v790
          %818 = vmatpush.msra.mxu0 %v789
          %819 = vmatpush.msra.mxu0 %v788
          %820 = vmatpush.msra.mxu0 %v787
          %821 = vmatpush.msra.mxu0 %v786
          %822 = vmatmul.f32.gmra.mxu0 %v785
          %v823 = vpop.f32.mrf.mxu0
          %v824 = vadd.f32 %v804, %v823
          %825 = vdwg.mxu0
          %826 = vst [vmem:[%s562] sm:$0xff] %v824
        $region100: #{tpu_custom_call.1} parent=63 // pred_fallthru
          _
        %s827 = sand.u32 %s303, 1
        %s828 = scalar_lea.sflag [#allocation8], %s827
        %s829 = sand.u32 %s303, 1
        %s830 = smul.addr %s829, 8
        %s831 = scalar_lea.vmem [#allocation18], %s830
        // Predicated region
        $region101: #{tpu_custom_call.1} parent=63 // pred_check
          %p832 = pneg %p313
        $region102: #{tpu_custom_call.1} parent=63 // pred_check_branch
          %834 = sbr.rel (%p832) target = $region104
        $region103: #{tpu_custom_call.1} parent=63 // pred_region
          %836 = vsyncadd %s828, 0
          %s837 = smul.addr %s37, 8
          %s838 = scalar_lea.hbm %s11, %s837
          %s840 = sshll.u32 %s831, 4
          %s841 = int_to_ptr.vmem [resolvable:$true] %s840
          %s842 = sshll.u32 %s838, 4
          %s843 = int_to_ptr.hbm [resolvable:$true] %s842
          %845 = dma.vmem_to_hbm [thread:$0]  %s841, 128, %s843, %s828
        $region104: #{tpu_custom_call.1} parent=63 // pred_fallthru
          _
      $region64: #{tpu_custom_call.1} parent=5 // pred_fallthru
        _
      %p846 = scmp.le.s32.totalorder 2, %s28
      // Predicated region
      $region105: #{tpu_custom_call.1} parent=5 // pred_check
        %p847 = pneg %p846
      $region106: #{tpu_custom_call.1} parent=5 // pred_check_branch
        %849 = sbr.rel (%p847) target = $region108
      $region107: #{tpu_custom_call.1} parent=5 // pred_region
        %s850 = ssub.s32 %s28, 2
        // Predicated region
        $region109: #{tpu_custom_call.1} parent=107 // pred_check
          %p851 = pneg %p319
        $region110: #{tpu_custom_call.1} parent=107 // pred_check_branch
          %853 = sbr.rel (%p851) target = $region112
        $region111: #{tpu_custom_call.1} parent=107 // pred_region
          %s854 = sand.u32 %s304, 1
          %s855 = scalar_lea.sflag [#allocation8], %s854
          %s856 = sand.u32 %s304, 1
          %s857 = smul.addr %s856, 8
          %s858 = scalar_lea.vmem [#allocation18], %s857
          %860 = dma.done %s855, 128
        $region112: #{tpu_custom_call.1} parent=107 // pred_fallthru
          _
      $region108: #{tpu_custom_call.1} parent=5 // pred_fallthru
        _
    $region6: #{tpu_custom_call.1} parent=1 // loop_footer
      %s32 = sadd.s32 1, %s28
    $region7: #{tpu_custom_call.1} parent=1 // loop_footer_branch
      %27 = sbr.rel target = $region3
    $region8: #{tpu_custom_call.1} parent=1 // loop_exit
      _
    %861 = vsyncpa [#allocation7], 1
    %s862 = scalar_lea.sflag [#allocation7], 1
    %863 = vsyncpa %s862, 1
    %864 = vsyncpa [#allocation10], 1
    %s865 = scalar_lea.sflag [#allocation10], 1
    %866 = vsyncpa %s865, 1
    %867 = vsyncpa [#allocation13], 1
    %868 = vsyncpa [#allocation16], 1
    %869 = vsyncpa [#allocation8], 1
    %s870 = scalar_lea.sflag [#allocation8], 1
    %871 = vsyncpa %s870, 1

</llo_original>
